<compile_context>
chip_gen: v7x
topology: tpu7x:2x2x1
jax: 0.10.0
libtpu: 0.0.40
codegen_flags: <defaults>
</compile_context>

<pallas_src>
import jax
import jax.numpy as jnp
from jax.experimental import pallas as pl
from jax.experimental.pallas import tpu as pltpu


def _pick_tile_d(D, C, HW, elem_bytes=4, budget_bytes=2 * 1024 * 1024):
    """Largest divisor of D whose (C, TD, H*W) f32 block fits the budget,
    preferring sublane-aligned (multiple-of-8) depth tiles."""
    fits = [c for c in range(1, D + 1)
            if D % c == 0 and C * c * HW * elem_bytes <= budget_bytes]
    if not fits:
        return 1
    aligned = [c for c in fits if c % 8 == 0]
    return max(aligned) if aligned else max(fits)


def _build_band_matrix(wsp, H, W, KS):
    """wsp: (2, KS, KS, KS) spatial-conv weight (Cin=2 [max, mean], Cout=1).

    Returns B of shape (KS, 2*H*W, H*W) with
      B[kd, c*H*W + ih*W + iw, oh*W + ow] = wsp[c, kd, ih-oh+P, iw-ow+P]
    whenever that tap index is in [0, KS) (else 0), so that for the D-padded
    2-channel map mm_pad (P zero rows along D only):
      conv(mm)[od, oh, ow] = sum_kd  mm_pad[od + kd, :] @ B[kd, :, oh*W + ow].
    H/W zero padding is folded into B, so the contraction dim is 2*H*W.
    """
    P = KS // 2
    dh = jnp.arange(H)[:, None] - jnp.arange(H)[None, :] + P      # ih - oh + P
    dw = jnp.arange(W)[:, None] - jnp.arange(W)[None, :] + P      # iw - ow + P
    vh = (dh >= 0) & (dh < KS)
    vw = (dw >= 0) & (dw < KS)
    dhc = jnp.clip(dh, 0, KS - 1)
    dwc = jnp.clip(dw, 0, KS - 1)
    # g[c, kd, ih, oh, iw, ow] = wsp[c, kd, ih-oh+P, iw-ow+P] (clipped, masked)
    g = wsp[:, :, dhc[:, :, None, None], dwc[None, None, :, :]]
    mask = (vh[:, :, None, None] & vw[None, None, :, :]).astype(wsp.dtype)
    g = g * mask[None, None]
    b = jnp.transpose(g, (1, 0, 2, 4, 3, 5))                      # (kd,c,ih,iw,oh,ow)
    return b.reshape(KS, 2 * H * W, H * W)


@jax.jit
def cbam3d_forward(x_ncdhw, w_ca1, w_ca2, w_sp):
    """x_ncdhw: (N, C, D, H, W) f32.
    w_ca1: (C//r, C, 1, 1, 1); w_ca2: (C, C//r, 1, 1, 1); w_sp: (1, 2, K, K, K).
    Returns (N, C, D, H, W) f32."""
    N, C, D, H, W = x_ncdhw.shape
    Cr = w_ca1.shape[0]
    KS = w_sp.shape[-1]
    P = KS // 2
    HW = H * W
    TD = _pick_tile_d(D, C, HW)
    Dt = D // TD
    Dp = D + 2 * P
    inv_cnt = 1.0 / float(D * H * W)
    HIGHEST = jax.lax.Precision.HIGHEST

    assert D % TD == 0 and Dp == D + 2 * P and KS % 2 == 1

    # native-layout view: (N, C, D, H*W) -- free reshapes only, no transposes.
    x4 = x_ncdhw.reshape(N, C, D, HW)
    w1m = w_ca1.reshape(Cr, C).T                                   # (C, Cr)
    w2m = w_ca2.reshape(C, Cr).T                                   # (Cr, C)
    bmat = _build_band_matrix(w_sp.reshape(2, KS, KS, KS), H, W, KS)

    blk_x = C * TD * HW * 4                                        # bytes per x block

    # ---- K1: per-channel partial sums (GAP numerator) ----------------------
    def csum_kernel(x_ref, s_ref):
        @pl.when(pl.program_id(1) == 0)
        def _():
            s_ref[...] = jnp.zeros_like(s_ref)
        s_ref[0] += jnp.sum(x_ref[0].astype(jnp.float32), axis=1)   # (C, HW)

    psum = pl.pallas_call(
        csum_kernel,
        out_shape=jax.ShapeDtypeStruct((N, C, HW), jnp.float32),
        grid=(N, Dt),
        in_specs=[pl.BlockSpec((1, C, TD, HW), lambda n, t: (n, 0, t, 0))],
        out_specs=pl.BlockSpec((1, C, HW), lambda n, t: (n, 0, 0)),
        compiler_params=pltpu.CompilerParams(
            dimension_semantics=("parallel", "arbitrary")),
    )(x4)

    # tiny squeeze/excite MLP, batched over N in plain JAX (hoisted out of K1).
    gap = jnp.sum(psum, axis=-1) * inv_cnt                          # (N, C)
    hid = jnp.maximum(jnp.dot(gap, w1m, precision=HIGHEST), 0.0)    # (N, Cr)
    ca = jax.nn.sigmoid(jnp.dot(hid, w2m, precision=HIGHEST))       # (N, C)
    # per-channel scale, pre-broadcast over HW (sublane-broadcast in-kernel).
    ca_hw = jnp.broadcast_to(ca[:, :, None, None], (N, C, 1, HW))

    # ---- K2: x*ca -> lane-dense [max_c | mean_c] map ------------------------
    def pool_kernel(x_ref, ca_ref, mm_ref):
        v = x_ref[0].astype(jnp.float32) * ca_ref[0]                # (C, TD, HW)
        mx = jnp.max(v, axis=0)                                     # (TD, HW)
        av = jnp.mean(v, axis=0)                                    # (TD, HW)
        mm_ref[0] = jnp.concatenate([mx, av], axis=-1)              # (TD, 2*HW)

    k2_vmem = int(max(1.5 * (2 * blk_x + 2 * TD * 2 * HW * 4 + C * HW * 4),
                      32 * 1024 * 1024))
    mm = pl.pallas_call(
        pool_kernel,
        out_shape=jax.ShapeDtypeStruct((N, D, 2 * HW), jnp.float32),
        grid=(N, Dt),
        in_specs=[
            pl.BlockSpec((1, C, TD, HW), lambda n, t: (n, 0, t, 0)),
            pl.BlockSpec((1, C, 1, HW), lambda n, t: (n, 0, 0, 0)),
        ],
        out_specs=pl.BlockSpec((1, TD, 2 * HW), lambda n, t: (n, t, 0)),
        compiler_params=pltpu.CompilerParams(
            dimension_semantics=("parallel", "parallel"),
            vmem_limit_bytes=k2_vmem),
    )(x4, ca_hw)

    # pad the small 2-channel map along D only (H/W padding lives inside bmat).
    mm_pad = jnp.pad(mm, ((0, 0), (P, P), (0, 0)))                  # (N, Dp, 2HW)

    # ---- K3: spatial conv (band matmuls) + sigmoid + final apply ------------
    def sa_apply_kernel(mm_ref, b_ref, x_ref, ca_ref, o_ref):
        d0 = pl.multiple_of(pl.program_id(1) * TD, TD)
        win = mm_ref[0, pl.ds(d0, TD + 2 * P), :]                   # (TD+2P, 2HW)
        acc = jnp.zeros((TD, HW), jnp.float32)
        for kd in range(KS):                                        # static sub-slices
            acc += jnp.dot(win[kd:kd + TD], b_ref[kd],
                           preferred_element_type=jnp.float32)
        sa = jax.nn.sigmoid(acc)                                    # (TD, HW)
        v = x_ref[0].astype(jnp.float32) * ca_ref[0]                # (C, TD, HW)
        o_ref[0] = (v * sa[None]).astype(o_ref.dtype)               # lane-dense store

    k3_vmem = int(max(1.5 * (Dp * 2 * HW * 4 + KS * 2 * HW * HW * 4
                             + 4 * blk_x + C * HW * 4),
                      32 * 1024 * 1024))
    out4 = pl.pallas_call(
        sa_apply_kernel,
        out_shape=jax.ShapeDtypeStruct((N, C, D, HW), jnp.float32),
        grid=(N, Dt),
        in_specs=[
            pl.BlockSpec((1, Dp, 2 * HW), lambda n, t: (n, 0, 0)),
            pl.BlockSpec((KS, 2 * HW, HW), lambda n, t: (0, 0, 0)),
            pl.BlockSpec((1, C, TD, HW), lambda n, t: (n, 0, t, 0)),
            pl.BlockSpec((1, C, 1, HW), lambda n, t: (n, 0, 0, 0)),
        ],
        out_specs=pl.BlockSpec((1, C, TD, HW), lambda n, t: (n, 0, t, 0)),
        compiler_params=pltpu.CompilerParams(
            dimension_semantics=("parallel", "parallel"),
            vmem_limit_bytes=k3_vmem),
    )(mm_pad, bmat, x4, ca_hw)

    return out4.reshape(N, C, D, H, W)


# ---------------------------------------------------------------------------
# Pure-JAX reference for verification (high precision).
# ---------------------------------------------------------------------------
def reference_forward(x, w_ca1, w_ca2, w_sp):
    HIGHEST = jax.lax.Precision.HIGHEST
    Cr = w_ca1.shape[0]
    C = w_ca2.shape[0]
    P = w_sp.shape[-1] // 2
    gap = jnp.mean(x, axis=(2, 3, 4))                               # (N, C)
    hid = jnp.maximum(jnp.dot(gap, w_ca1.reshape(Cr, C).T, precision=HIGHEST), 0.0)
    ca = jax.nn.sigmoid(jnp.dot(hid, w_ca2.reshape(C, Cr).T, precision=HIGHEST))
    xc = x * ca[:, :, None, None, None]
    mxp = jnp.max(xc, axis=1, keepdims=True)
    avp = jnp.mean(xc, axis=1, keepdims=True)
    sa_in = jnp.concatenate([mxp, avp], axis=1)                     # (N, 2, D, H, W)
    sa = jax.lax.conv_general_dilated(
        sa_in, w_sp, window_strides=(1, 1, 1),
        padding=((P, P), (P, P), (P, P)),
        dimension_numbers=("NCDHW", "OIDHW", "NCDHW"),
        precision=HIGHEST)
    sa = jax.nn.sigmoid(sa)                                         # (N, 1, D, H, W)
    return xc * sa


if __name__ == "__main__":
    key = jax.random.PRNGKey(0)
    k1, k2, k3, k4 = jax.random.split(key, 4)

    # Small shapes consistent with CBAMBlock3D(channels=32, reduction=8, k=5).
    N, C, D, H, W = 2, 32, 8, 8, 8
    reduction, KS = 8, 5
    Cr = C // reduction

    x = jax.random.normal(k1, (N, C, D, H, W), jnp.float32)
    w_ca1 = 0.3 * jax.random.normal(k2, (Cr, C, 1, 1, 1), jnp.float32)
    w_ca2 = 0.3 * jax.random.normal(k3, (C, Cr, 1, 1, 1), jnp.float32)
    w_sp = 0.05 * jax.random.normal(k4, (1, 2, KS, KS, KS), jnp.float32)

    out = jax.block_until_ready(cbam3d_forward(x, w_ca1, w_ca2, w_sp))
    assert out.shape == (N, C, D, H, W), out.shape

    ref = reference_forward(x, w_ca1, w_ca2, w_sp)
    max_err = float(jnp.max(jnp.abs(out - ref)))
    # Full-f32 agreement of the band-matmul conv is typically ~1e-5; 5e-4 leaves
    # headroom for a reduced-precision MXU default on f32 dots while still
    # catching any tap-order / padding off-by-one (which would be >1e-2).
    assert max_err < 5e-4, f"max abs error {max_err}"

    print("KERNEL_OK")
</pallas_src>

<mosaic_0001>
module attributes {stable_mosaic.version = 11 : i64} {
  func.func @csum_kernel(%arg0: i32, %arg1: i32, %arg2: memref<1x32x8x64xf32, #tpu.memory_space<vmem>>, %arg3: memref<1x32x64xf32, #tpu.memory_space<vmem>>) attributes {dimension_semantics = [#tpu.dimension_semantics<parallel>, #tpu.dimension_semantics<arbitrary>], iteration_bounds = array<i64: 2, 1>, scalar_prefetch = 0 : i64, scratch_operands = 0 : i64, tpu.core_type = #tpu.core_type<tc>, window_params = [{transform_indices = @transform_0, window_bounds = array<i64: 1, 32, 8, 64>}, {transform_indices = @transform_1, window_bounds = array<i64: 1, 32, 64>}]} {
    %c0_i32 = arith.constant 0 : i32
    %0 = arith.cmpi eq, %arg1, %c0_i32 : i32
    %1 = arith.extui %0 : i1 to i32
    %c0_i32_0 = arith.constant 0 : i32
    %2 = arith.cmpi ne, %1, %c0_i32_0 : i32
    scf.if %2 {
      %cst_10 = arith.constant 0.000000e+00 : f32
      %12 = vector.broadcast %cst_10 : f32 to vector<1x32x64xf32>
      %c0_11 = arith.constant 0 : index
      %c0_12 = arith.constant 0 : index
      %c0_13 = arith.constant 0 : index
      %13 = vector.load %arg3[%c0_11, %c0_12, %c0_13] : memref<1x32x64xf32, #tpu.memory_space<vmem>>, vector<1x32x64xf32>
      tpu.vector_store %arg3[%c0_11, %c0_12, %c0_13], %12 {strides = array<i32>} : memref<1x32x64xf32, #tpu.memory_space<vmem>>, vector<1x32x64xf32>,
    } else {
    }
    %c0 = arith.constant 0 : index
    %c0_1 = arith.constant 0 : index
    %c0_2 = arith.constant 0 : index
    %3 = vector.load %arg3[%c0, %c0_1, %c0_2] : memref<1x32x64xf32, #tpu.memory_space<vmem>>, vector<1x32x64xf32>
    %4 = vector.shape_cast %3 : vector<1x32x64xf32> to vector<32x64xf32>
    %c0_3 = arith.constant 0 : index
    %c0_4 = arith.constant 0 : index
    %c0_5 = arith.constant 0 : index
    %c0_6 = arith.constant 0 : index
    %5 = vector.load %arg2[%c0_3, %c0_4, %c0_5, %c0_6] : memref<1x32x8x64xf32, #tpu.memory_space<vmem>>, vector<1x32x8x64xf32>
    %6 = vector.shape_cast %5 : vector<1x32x8x64xf32> to vector<32x8x64xf32>
    %cst = arith.constant dense<0.000000e+00> : vector<32x64xf32>
    %7 = vector.multi_reduction <add>, %6, %cst [1] : vector<32x8x64xf32> to vector<32x64xf32>
    %8 = arith.addf %4, %7 : vector<32x64xf32>
    %c0_7 = arith.constant 0 : index
    %c0_8 = arith.constant 0 : index
    %c0_9 = arith.constant 0 : index
    %9 = vector.load %arg3[%c0_7, %c0_8, %c0_9] : memref<1x32x64xf32, #tpu.memory_space<vmem>>, vector<1x32x64xf32>
    %10 = vector.shape_cast %9 : vector<1x32x64xf32> to vector<32x64xf32>
    %11 = vector.shape_cast %8 : vector<32x64xf32> to vector<1x32x64xf32>
    tpu.vector_store %arg3[%c0_7, %c0_8, %c0_9], %11 {strides = array<i32>} : memref<1x32x64xf32, #tpu.memory_space<vmem>>, vector<1x32x64xf32>,
    return
  }
  func.func @transform_0(%arg0: i32, %arg1: i32) -> (i32, i32, i32, i32) {
    %c0_i32 = arith.constant 0 : i32
    %c0_i32_0 = arith.constant 0 : i32
    %c0_i32_1 = arith.constant 0 : i32
    return %arg0, %c0_i32, %arg1, %c0_i32_0 : i32, i32, i32, i32
  }
  func.func @transform_1(%arg0: i32, %arg1: i32) -> (i32, i32, i32) {
    %c0_i32 = arith.constant 0 : i32
    %c0_i32_0 = arith.constant 0 : i32
    %c0_i32_1 = arith.constant 0 : i32
    return %arg0, %c0_i32, %c0_i32_0 : i32, i32, i32
  }
}

module attributes {stable_mosaic.version = 11 : i64} {
  func.func @pool_kernel(%arg0: i32, %arg1: i32, %arg2: memref<1x32x8x64xf32, #tpu.memory_space<vmem>>, %arg3: memref<1x32x1x64xf32, #tpu.memory_space<vmem>>, %arg4: memref<1x8x128xf32, #tpu.memory_space<vmem>>) attributes {dimension_semantics = [#tpu.dimension_semantics<parallel>, #tpu.dimension_semantics<parallel>], iteration_bounds = array<i64: 2, 1>, scalar_prefetch = 0 : i64, scratch_operands = 0 : i64, tpu.core_type = #tpu.core_type<tc>, window_params = [{transform_indices = @transform_0, window_bounds = array<i64: 1, 32, 8, 64>}, {transform_indices = @transform_1, window_bounds = array<i64: 1, 32, 1, 64>}, {transform_indices = @transform_2, window_bounds = array<i64: 1, 8, 128>}]} {
    %c0 = arith.constant 0 : index
    %c0_0 = arith.constant 0 : index
    %c0_1 = arith.constant 0 : index
    %c0_2 = arith.constant 0 : index
    %0 = vector.load %arg2[%c0, %c0_0, %c0_1, %c0_2] : memref<1x32x8x64xf32, #tpu.memory_space<vmem>>, vector<1x32x8x64xf32>
    %1 = vector.shape_cast %0 : vector<1x32x8x64xf32> to vector<32x8x64xf32>
    %c0_3 = arith.constant 0 : index
    %c0_4 = arith.constant 0 : index
    %c0_5 = arith.constant 0 : index
    %c0_6 = arith.constant 0 : index
    %2 = vector.load %arg3[%c0_3, %c0_4, %c0_5, %c0_6] : memref<1x32x1x64xf32, #tpu.memory_space<vmem>>, vector<1x32x1x64xf32>
    %3 = vector.shape_cast %2 : vector<1x32x1x64xf32> to vector<32x1x64xf32>
    %4 = vector.broadcast %3 : vector<32x1x64xf32> to vector<32x8x64xf32>
    %5 = arith.mulf %1, %4 : vector<32x8x64xf32>
    %cst = arith.constant dense<0xFF800000> : vector<8x64xf32>
    %6 = vector.multi_reduction <maximumf>, %5, %cst [0] : vector<32x8x64xf32> to vector<8x64xf32>
    %cst_7 = arith.constant dense<0.000000e+00> : vector<8x64xf32>
    %7 = vector.multi_reduction <add>, %5, %cst_7 [0] : vector<32x8x64xf32> to vector<8x64xf32>
    %cst_8 = arith.constant 3.200000e+01 : f32
    %8 = vector.broadcast %cst_8 : f32 to vector<8x64xf32>
    %9 = arith.divf %7, %8 : vector<8x64xf32>
    %10 = tpu.concatenate %6, %9 in 1 : vector<8x64xf32>, vector<8x64xf32> -> vector<8x128xf32>
    %c0_9 = arith.constant 0 : index
    %c0_10 = arith.constant 0 : index
    %c0_11 = arith.constant 0 : index
    %11 = vector.load %arg4[%c0_9, %c0_10, %c0_11] : memref<1x8x128xf32, #tpu.memory_space<vmem>>, vector<1x8x128xf32>
    %12 = vector.shape_cast %11 : vector<1x8x128xf32> to vector<8x128xf32>
    %13 = vector.shape_cast %10 : vector<8x128xf32> to vector<1x8x128xf32>
    tpu.vector_store %arg4[%c0_9, %c0_10, %c0_11], %13 {strides = array<i32>} : memref<1x8x128xf32, #tpu.memory_space<vmem>>, vector<1x8x128xf32>,
    return
  }
  func.func @transform_0(%arg0: i32, %arg1: i32) -> (i32, i32, i32, i32) {
    %c0_i32 = arith.constant 0 : i32
    %c0_i32_0 = arith.constant 0 : i32
    %c0_i32_1 = arith.constant 0 : i32
    return %arg0, %c0_i32, %arg1, %c0_i32_0 : i32, i32, i32, i32
  }
  func.func @transform_1(%arg0: i32, %arg1: i32) -> (i32, i32, i32, i32) {
    %c0_i32 = arith.constant 0 : i32
    %c0_i32_0 = arith.constant 0 : i32
    %c0_i32_1 = arith.constant 0 : i32
    %c0_i32_2 = arith.constant 0 : i32
    return %arg0, %c0_i32, %c0_i32_0, %c0_i32_1 : i32, i32, i32, i32
  }
  func.func @transform_2(%arg0: i32, %arg1: i32) -> (i32, i32, i32) {
    %c0_i32 = arith.constant 0 : i32
    %c0_i32_0 = arith.constant 0 : i32
    return %arg0, %arg1, %c0_i32 : i32, i32, i32
  }
}

module attributes {stable_mosaic.version = 11 : i64} {
  func.func @sa_apply_kernel(%arg0: i32, %arg1: i32, %arg2: memref<1x12x128xf32, #tpu.memory_space<vmem>>, %arg3: memref<5x128x64xf32, #tpu.memory_space<vmem>>, %arg4: memref<1x32x8x64xf32, #tpu.memory_space<vmem>>, %arg5: memref<1x32x1x64xf32, #tpu.memory_space<vmem>>, %arg6: memref<1x32x8x64xf32, #tpu.memory_space<vmem>>) attributes {dimension_semantics = [#tpu.dimension_semantics<parallel>, #tpu.dimension_semantics<parallel>], iteration_bounds = array<i64: 2, 1>, scalar_prefetch = 0 : i64, scratch_operands = 0 : i64, tpu.core_type = #tpu.core_type<tc>, window_params = [{transform_indices = @transform_0, window_bounds = array<i64: 1, 12, 128>}, {pipeline_mode = #tpu.pipeline_mode<synchronous>, transform_indices = @transform_1, window_bounds = array<i64: 5, 128, 64>}, {transform_indices = @transform_2, window_bounds = array<i64: 1, 32, 8, 64>}, {transform_indices = @transform_3, window_bounds = array<i64: 1, 32, 1, 64>}, {transform_indices = @transform_4, window_bounds = array<i64: 1, 32, 8, 64>}]} {
    %c8_i32 = arith.constant 8 : i32
    %0 = arith.muli %arg1, %c8_i32 : i32
    %1 = tpu.assume_multiple %0, 8 : i32
    %c0 = arith.constant 0 : index
    %2 = arith.index_cast %1 : i32 to index
    %c0_0 = arith.constant 0 : index
    %3 = vector.load %arg2[%c0, %2, %c0_0] : memref<1x12x128xf32, #tpu.memory_space<vmem>>, vector<1x12x128xf32>
    %4 = vector.shape_cast %3 : vector<1x12x128xf32> to vector<12x128xf32>
    %cst = arith.constant 0.000000e+00 : f32
    %5 = vector.broadcast %cst : f32 to vector<8x64xf32>
    %6 = vector.extract_strided_slice %4 {offsets = [0, 0], sizes = [8, 128], strides = [1, 1]} : vector<12x128xf32> to vector<8x128xf32>
    %c0_1 = arith.constant 0 : index
    %c0_2 = arith.constant 0 : index
    %c0_3 = arith.constant 0 : index
    %7 = vector.load %arg3[%c0_1, %c0_2, %c0_3] : memref<5x128x64xf32, #tpu.memory_space<vmem>>, vector<1x128x64xf32>
    %8 = vector.shape_cast %7 : vector<1x128x64xf32> to vector<128x64xf32>
    %cst_4 = arith.constant dense<0.000000e+00> : vector<8x64xf32>
    %9 = tpu.matmul %6, %8, %cst_4 {dimension_numbers = #tpu.dot_dimension_numbers<[1], [0], [0], [1], [0, 0, 1, 1], [], []>} : vector<8x128xf32>, vector<128x64xf32>, vector<8x64xf32> -> vector<8x64xf32>
    %10 = arith.addf %5, %9 : vector<8x64xf32>
    %11 = vector.extract_strided_slice %4 {offsets = [1, 0], sizes = [8, 128], strides = [1, 1]} : vector<12x128xf32> to vector<8x128xf32>
    %c1 = arith.constant 1 : index
    %c0_5 = arith.constant 0 : index
    %c0_6 = arith.constant 0 : index
    %12 = vector.load %arg3[%c1, %c0_5, %c0_6] : memref<5x128x64xf32, #tpu.memory_space<vmem>>, vector<1x128x64xf32>
    %13 = vector.shape_cast %12 : vector<1x128x64xf32> to vector<128x64xf32>
    %cst_7 = arith.constant dense<0.000000e+00> : vector<8x64xf32>
    %14 = tpu.matmul %11, %13, %cst_7 {dimension_numbers = #tpu.dot_dimension_numbers<[1], [0], [0], [1], [0, 0, 1, 1], [], []>} : vector<8x128xf32>, vector<128x64xf32>, vector<8x64xf32> -> vector<8x64xf32>
    %15 = arith.addf %10, %14 : vector<8x64xf32>
    %16 = vector.extract_strided_slice %4 {offsets = [2, 0], sizes = [8, 128], strides = [1, 1]} : vector<12x128xf32> to vector<8x128xf32>
    %c2 = arith.constant 2 : index
    %c0_8 = arith.constant 0 : index
    %c0_9 = arith.constant 0 : index
    %17 = vector.load %arg3[%c2, %c0_8, %c0_9] : memref<5x128x64xf32, #tpu.memory_space<vmem>>, vector<1x128x64xf32>
    %18 = vector.shape_cast %17 : vector<1x128x64xf32> to vector<128x64xf32>
    %cst_10 = arith.constant dense<0.000000e+00> : vector<8x64xf32>
    %19 = tpu.matmul %16, %18, %cst_10 {dimension_numbers = #tpu.dot_dimension_numbers<[1], [0], [0], [1], [0, 0, 1, 1], [], []>} : vector<8x128xf32>, vector<128x64xf32>, vector<8x64xf32> -> vector<8x64xf32>
    %20 = arith.addf %15, %19 : vector<8x64xf32>
    %21 = vector.extract_strided_slice %4 {offsets = [3, 0], sizes = [8, 128], strides = [1, 1]} : vector<12x128xf32> to vector<8x128xf32>
    %c3 = arith.constant 3 : index
    %c0_11 = arith.constant 0 : index
    %c0_12 = arith.constant 0 : index
    %22 = vector.load %arg3[%c3, %c0_11, %c0_12] : memref<5x128x64xf32, #tpu.memory_space<vmem>>, vector<1x128x64xf32>
    %23 = vector.shape_cast %22 : vector<1x128x64xf32> to vector<128x64xf32>
    %cst_13 = arith.constant dense<0.000000e+00> : vector<8x64xf32>
    %24 = tpu.matmul %21, %23, %cst_13 {dimension_numbers = #tpu.dot_dimension_numbers<[1], [0], [0], [1], [0, 0, 1, 1], [], []>} : vector<8x128xf32>, vector<128x64xf32>, vector<8x64xf32> -> vector<8x64xf32>
    %25 = arith.addf %20, %24 : vector<8x64xf32>
    %26 = vector.extract_strided_slice %4 {offsets = [4, 0], sizes = [8, 128], strides = [1, 1]} : vector<12x128xf32> to vector<8x128xf32>
    %c4 = arith.constant 4 : index
    %c0_14 = arith.constant 0 : index
    %c0_15 = arith.constant 0 : index
    %27 = vector.load %arg3[%c4, %c0_14, %c0_15] : memref<5x128x64xf32, #tpu.memory_space<vmem>>, vector<1x128x64xf32>
    %28 = vector.shape_cast %27 : vector<1x128x64xf32> to vector<128x64xf32>
    %cst_16 = arith.constant dense<0.000000e+00> : vector<8x64xf32>
    %29 = tpu.matmul %26, %28, %cst_16 {dimension_numbers = #tpu.dot_dimension_numbers<[1], [0], [0], [1], [0, 0, 1, 1], [], []>} : vector<8x128xf32>, vector<128x64xf32>, vector<8x64xf32> -> vector<8x64xf32>
    %30 = arith.addf %25, %29 : vector<8x64xf32>
    %31 = arith.negf %30 : vector<8x64xf32>
    %32 = math.exp %31 : vector<8x64xf32>
    %cst_17 = arith.constant 1.000000e+00 : f32
    %33 = vector.broadcast %cst_17 : f32 to vector<8x64xf32>
    %34 = arith.addf %33, %32 : vector<8x64xf32>
    %35 = arith.divf %33, %34 : vector<8x64xf32>
    %c0_18 = arith.constant 0 : index
    %c0_19 = arith.constant 0 : index
    %c0_20 = arith.constant 0 : index
    %c0_21 = arith.constant 0 : index
    %36 = vector.load %arg4[%c0_18, %c0_19, %c0_20, %c0_21] : memref<1x32x8x64xf32, #tpu.memory_space<vmem>>, vector<1x32x8x64xf32>
    %37 = vector.shape_cast %36 : vector<1x32x8x64xf32> to vector<32x8x64xf32>
    %c0_22 = arith.constant 0 : index
    %c0_23 = arith.constant 0 : index
    %c0_24 = arith.constant 0 : index
    %c0_25 = arith.constant 0 : index
    %38 = vector.load %arg5[%c0_22, %c0_23, %c0_24, %c0_25] : memref<1x32x1x64xf32, #tpu.memory_space<vmem>>, vector<1x32x1x64xf32>
    %39 = vector.shape_cast %38 : vector<1x32x1x64xf32> to vector<32x1x64xf32>
    %40 = vector.broadcast %39 : vector<32x1x64xf32> to vector<32x8x64xf32>
    %41 = arith.mulf %37, %40 : vector<32x8x64xf32>
    %42 = vector.shape_cast %35 : vector<8x64xf32> to vector<1x8x64xf32>
    %43 = vector.broadcast %42 : vector<1x8x64xf32> to vector<32x8x64xf32>
    %44 = arith.mulf %41, %43 : vector<32x8x64xf32>
    %c0_26 = arith.constant 0 : index
    %c0_27 = arith.constant 0 : index
    %c0_28 = arith.constant 0 : index
    %c0_29 = arith.constant 0 : index
    %45 = vector.load %arg6[%c0_26, %c0_27, %c0_28, %c0_29] : memref<1x32x8x64xf32, #tpu.memory_space<vmem>>, vector<1x32x8x64xf32>
    %46 = vector.shape_cast %45 : vector<1x32x8x64xf32> to vector<32x8x64xf32>
    %47 = vector.shape_cast %44 : vector<32x8x64xf32> to vector<1x32x8x64xf32>
    tpu.vector_store %arg6[%c0_26, %c0_27, %c0_28, %c0_29], %47 {strides = array<i32>} : memref<1x32x8x64xf32, #tpu.memory_space<vmem>>, vector<1x32x8x64xf32>,
    return
  }
  func.func @transform_0(%arg0: i32, %arg1: i32) -> (i32, i32, i32) {
    %c0_i32 = arith.constant 0 : i32
    %c0_i32_0 = arith.constant 0 : i32
    %c0_i32_1 = arith.constant 0 : i32
    return %arg0, %c0_i32, %c0_i32_0 : i32, i32, i32
  }
  func.func @transform_1(%arg0: i32, %arg1: i32) -> (i32, i32, i32) {
    %c0_i32 = arith.constant 0 : i32
    %c0_i32_0 = arith.constant 0 : i32
    %c0_i32_1 = arith.constant 0 : i32
    %c0_i32_2 = arith.constant 0 : i32
    return %c0_i32, %c0_i32_0, %c0_i32_1 : i32, i32, i32
  }
  func.func @transform_2(%arg0: i32, %arg1: i32) -> (i32, i32, i32, i32) {
    %c0_i32 = arith.constant 0 : i32
    %c0_i32_0 = arith.constant 0 : i32
    %c0_i32_1 = arith.constant 0 : i32
    return %arg0, %c0_i32, %arg1, %c0_i32_0 : i32, i32, i32, i32
  }
  func.func @transform_3(%arg0: i32, %arg1: i32) -> (i32, i32, i32, i32) {
    %c0_i32 = arith.constant 0 : i32
    %c0_i32_0 = arith.constant 0 : i32
    %c0_i32_1 = arith.constant 0 : i32
    %c0_i32_2 = arith.constant 0 : i32
    return %arg0, %c0_i32, %c0_i32_0, %c0_i32_1 : i32, i32, i32, i32
  }
  func.func @transform_4(%arg0: i32, %arg1: i32) -> (i32, i32, i32, i32) {
    %c0_i32 = arith.constant 0 : i32
    %c0_i32_0 = arith.constant 0 : i32
    %c0_i32_1 = arith.constant 0 : i32
    return %arg0, %c0_i32, %arg1, %c0_i32_0 : i32, i32, i32, i32
  }
}

</mosaic_0001>

<llo_original>
// kernel: cbam3d_forward.3
$region0: #{cbam3d_forward.3}
  #allocation0 [shape = 'u32[]', space=smem, size = 0x4, offset = 0x4, fixed_abs, tag = 'smem constant byte address 0x4 - core index']
  #allocation1 [shape = 'u32[144,128]{1,0:T(1,128)}', space=vmem, size = 0x12000, scoped, tag = 'internal scratch']
  %s0 = inlined_call_operand.vmem [shape: f32[2,32,8,64], index: 0, kind: input, shape index: {}]
  %s1 = inlined_call_operand.vmem [shape: f32[2,32,64], index: 1, kind: output, shape index: {}]
  %s2 = sld [smem:[#allocation0]]
  $region41: #{cbam3d_forward.3} parent=0
    _
  %s4 = ssub.s32 1, %s2
  %s5 = scalar_select 0, %s4, %s2
  loop: start=0, step=1, limit=4
  $region2: #{cbam3d_forward.3} parent=0 // loop_pre_header
    _
  $region3: #{cbam3d_forward.3} parent=0 // loop_header
    %s7 = sphi 0, %s11
    %p8 = scmp.ge.s32.totalorder %s7, 4
    %s14 = sphi 0, %s26
    %s15 = sphi 0, %s22
    %s16 = sphi 0, %s14
    %s17 = sphi 0, %s15
    %s18 = sphi 0, %s16
    %s19 = sphi 0, %s17
    %s31 = sphi 0, %s33
    %s34 = sphi 0, %s31
    %s35 = sphi 0, %s34
    %s51 = sphi 0, %s35
    %s57 = sphi 0, %s59
    %s60 = sphi 0, %s57
    %s61 = sphi 0, %s60
    %s77 = sphi 0, %s61
  $region4: #{cbam3d_forward.3} parent=0 // loop_header_branch
    %10 = sbr.rel (%p8) target = $region8
  $region5: #{cbam3d_forward.3} parent=0 // loop_body
    %s12 = ssub.s32 %s7, 1
    %s13 = ssub.s32 %s7, 2
    %s20 = sadd.s32 1, %s15
    %p21 = scmp.ge.s32.totalorder %s20, 1
    %s22 = scalar_select %p21, 0, %s20
    %s23 = sadd.s32 1, %s14
    %s24 = scalar_select %p21, %s23, %s14
    %p25 = scmp.ge.s32.totalorder %s24, 2
    %s26 = scalar_select %p25, 0, %s24
    %s27 = ssub.s32 %s14, %s26
    %s28 = ssub.s32 %s15, %s22
    %s29 = sor.u32 %s27, %s28
    %p30 = scmp.eq.s32.totalorder %s29, 0
    %s32 = sadd.s32 %s31, 1
    %s33 = scalar_select %p30, %s31, %s32
    %p36 = pneg %p30
    %p37 = scmp.eq.s32.totalorder %s7, 1
    %p38 = por %p36, %p37
    %p39 = scmp.ne.s32.totalorder %s31, %s34
    %p40 = scmp.eq.s32.totalorder %s7, 0
    %p41 = por %p39, %p40
    %p42 = scmp.ne.s32.totalorder %s31, %s34
    %p43 = scmp.eq.s32.totalorder %s12, 1
    %p44 = por %p42, %p43
    %p45 = scmp.ne.s32.totalorder %s34, %s35
    %p46 = scmp.eq.s32.totalorder %s12, 0
    %p47 = por %p45, %p46
    %p48 = scmp.ne.s32.totalorder %s34, %s35
    %p49 = scmp.eq.s32.totalorder %s13, 1
    %p50 = por %p48, %p49
    %p52 = scmp.ne.s32.totalorder %s35, %s51
    %p53 = scmp.eq.s32.totalorder %s13, 0
    %p54 = por %p52, %p53
    %s55 = ssub.s32 %s14, %s26
    %p56 = scmp.eq.s32.totalorder %s55, 0
    %s58 = sadd.s32 %s57, 1
    %s59 = scalar_select %p56, %s57, %s58
    %p62 = pneg %p56
    %p63 = scmp.eq.s32.totalorder %s7, 1
    %p64 = por %p62, %p63
    %p65 = scmp.ne.s32.totalorder %s57, %s60
    %p66 = scmp.eq.s32.totalorder %s7, 0
    %p67 = por %p65, %p66
    %p68 = scmp.ne.s32.totalorder %s57, %s60
    %p69 = scmp.eq.s32.totalorder %s12, 1
    %p70 = por %p68, %p69
    %p71 = scmp.ne.s32.totalorder %s60, %s61
    %p72 = scmp.eq.s32.totalorder %s12, 0
    %p73 = por %p71, %p72
    %p74 = scmp.ne.s32.totalorder %s60, %s61
    %p75 = scmp.eq.s32.totalorder %s13, 1
    %p76 = por %p74, %p75
    %p78 = scmp.ne.s32.totalorder %s61, %s77
    %p79 = scmp.eq.s32.totalorder %s13, 0
    %p80 = por %p78, %p79
    %p81 = scmp.le.s32.totalorder 1, %s7
    %p82 = scmp.lt.s32.totalorder %s7, 3
    %p83 = pnand %p81, %p82
    %p84 = pneg %p83
    // Predicated region
    $region9: #{cbam3d_forward.3} parent=5 // pred_check
      _
    $region10: #{cbam3d_forward.3} parent=5 // pred_check_branch
      %86 = sbr.rel (%p83) target = $region12
    $region11: #{cbam3d_forward.3} parent=5 // pred_region
      %s87 = ssub.s32 %s7, 1
    $region12: #{cbam3d_forward.3} parent=5 // pred_fallthru
      _
    %p88 = scmp.lt.s32.totalorder %s7, 2
    // Predicated region
    $region13: #{cbam3d_forward.3} parent=5 // pred_check
      %p89 = pneg %p88
    $region14: #{cbam3d_forward.3} parent=5 // pred_check_branch
      %91 = sbr.rel (%p89) target = $region16
    $region15: #{cbam3d_forward.3} parent=5 // pred_region
      // Predicated region
      $region17: #{cbam3d_forward.3} parent=15 // pred_check
        %p92 = pneg %p41
      $region18: #{cbam3d_forward.3} parent=15 // pred_check_branch
        %94 = sbr.rel (%p92) target = $region20
      $region19: #{cbam3d_forward.3} parent=15 // pred_region
        %p95 = scmp.lt.s32.totalorder %s14, 1
        %s96 = scalar_select %p95, %s14, 1
        %p97 = scmp.lt.s32.totalorder %s15, 0
        %s98 = scalar_select %p97, %s15, 0
        %s99 = smul.addr %s96, 32
        %s100 = sadd.s32 %s98, %s99
        %s101 = smul.addr %s100, 8
        %s102 = scalar_lea.vmem %s0, %s101
      $region20: #{cbam3d_forward.3} parent=15 // pred_fallthru
        _
    $region16: #{cbam3d_forward.3} parent=5 // pred_fallthru
      _
    %p103 = scmp.le.s32.totalorder 1, %s7
    %p104 = scmp.lt.s32.totalorder %s7, 3
    %p105 = pnand %p103, %p104
    %p106 = pneg %p105
    // Predicated region
    $region21: #{cbam3d_forward.3} parent=5 // pred_check
      _
    $region22: #{cbam3d_forward.3} parent=5 // pred_check_branch
      %108 = sbr.rel (%p105) target = $region24
    $region23: #{cbam3d_forward.3} parent=5 // pred_region
      %s109 = ssub.s32 %s7, 1
      %p110 = scmp.lt.s32.totalorder %s16, 1
      %s111 = scalar_select %p110, %s16, 1
      %p112 = scmp.lt.s32.totalorder %s17, 0
      %s113 = scalar_select %p112, %s17, 0
      %s114 = smul.addr %s111, 32
      %s115 = sadd.s32 %s113, %s114
      %s116 = smul.addr %s115, 8
      %s117 = scalar_lea.vmem %s0, %s116
      %p118 = pneg %p47
      %p119 = pneg %p44
      %p120 = pneg %p73
      %p121 = pneg %p70
      %p122 = scmp.lt.s32.totalorder %s16, 1
      %s123 = scalar_select %p122, %s16, 1
      %s124 = smul.addr %s123, 4
      %s125 = smul.addr %s124, 8
      %s126 = scalar_lea.vmem %s1, %s125
      %p127 = scmp.lt.s32.totalorder %s16, 1
      %s128 = scalar_select %p127, %s16, 1
      %p129 = scmp.lt.s32.totalorder %s17, 0
      %s130 = scalar_select %p129, %s17, 0
      %s131 = smul.addr %s128, 32
      %s132 = sadd.s32 %s130, %s131
      %s133 = smul.addr %s132, 8
      %s134 = scalar_lea.vmem %s0, %s133
      %p135 = scmp.lt.s32.totalorder %s16, 1
      %s136 = scalar_select %p135, %s16, 1
      %s137 = smul.addr %s136, 4
      %s138 = smul.addr %s137, 8
      %s139 = scalar_lea.vmem %s1, %s138
      %p140 = scmp.eq.s32.totalorder %s17, 0
      // Predicated region
      $region25: #{cbam3d_forward.3} parent=23 // pred_check
        %p141 = pneg %p140
      $region26: #{cbam3d_forward.3} parent=23 // pred_check_branch
        %143 = sbr.rel (%p141) target = $region28
      $region27: #{cbam3d_forward.3} parent=23 // pred_region
        %vm144 = vcmask 523264
        %145 = vst.msk [vmem:[%s139] sm:$0xff] %vm144, 0.0
        %146 = vst.msk [vmem:[%s139 + $0x8] sm:$0xff] %vm144, 0.0
        %147 = vst.msk [vmem:[%s139 + $0x10] sm:$0xff] %vm144, 0.0
        %148 = vst.msk [vmem:[%s139 + $0x18] sm:$0xff] %vm144, 0.0
      $region28: #{cbam3d_forward.3} parent=23 // pred_fallthru
        _
      %v149 = vld [vmem:[%s139] sm:$0xff]
      %v150 = vld [vmem:[%s139 + $0x8] sm:$0xff]
      %v151 = vld [vmem:[%s139 + $0x10] sm:$0xff]
      %v152 = vld [vmem:[%s139 + $0x18] sm:$0xff]
      %v153 = vld [vmem:[%s134] sm:$0xff]
      %v154 = vld [vmem:[%s134 + $0x8] sm:$0xff]
      %v155 = vld [vmem:[%s134 + $0x10] sm:$0xff]
      %v156 = vld [vmem:[%s134 + $0x18] sm:$0xff]
      %v157 = vld [vmem:[%s134 + $0x20] sm:$0xff]
      %v158 = vld [vmem:[%s134 + $0x28] sm:$0xff]
      %v159 = vld [vmem:[%s134 + $0x30] sm:$0xff]
      %v160 = vld [vmem:[%s134 + $0x38] sm:$0xff]
      %v161 = vld [vmem:[%s134 + $0x40] sm:$0xff]
      %v162 = vld [vmem:[%s134 + $0x48] sm:$0xff]
      %v163 = vld [vmem:[%s134 + $0x50] sm:$0xff]
      %v164 = vld [vmem:[%s134 + $0x58] sm:$0xff]
      %v165 = vld [vmem:[%s134 + $0x60] sm:$0xff]
      %v166 = vld [vmem:[%s134 + $0x68] sm:$0xff]
      %v167 = vld [vmem:[%s134 + $0x70] sm:$0xff]
      %v168 = vld [vmem:[%s134 + $0x78] sm:$0xff]
      %v169 = vld [vmem:[%s134 + $0x80] sm:$0xff]
      %v170 = vld [vmem:[%s134 + $0x88] sm:$0xff]
      %v171 = vld [vmem:[%s134 + $0x90] sm:$0xff]
      %v172 = vld [vmem:[%s134 + $0x98] sm:$0xff]
      %v173 = vld [vmem:[%s134 + $0xa0] sm:$0xff]
      %v174 = vld [vmem:[%s134 + $0xa8] sm:$0xff]
      %v175 = vld [vmem:[%s134 + $0xb0] sm:$0xff]
      %v176 = vld [vmem:[%s134 + $0xb8] sm:$0xff]
      %v177 = vld [vmem:[%s134 + $0xc0] sm:$0xff]
      %v178 = vld [vmem:[%s134 + $0xc8] sm:$0xff]
      %v179 = vld [vmem:[%s134 + $0xd0] sm:$0xff]
      %v180 = vld [vmem:[%s134 + $0xd8] sm:$0xff]
      %v181 = vld [vmem:[%s134 + $0xe0] sm:$0xff]
      %v182 = vld [vmem:[%s134 + $0xe8] sm:$0xff]
      %v183 = vld [vmem:[%s134 + $0xf0] sm:$0xff]
      %v184 = vld [vmem:[%s134 + $0xf8] sm:$0xff]
      %vm185 = vcmask 523264
      %v186 = vsel %vm185, %v153, 0.0
      %v187 = vrot.slane %v186, 4
      %v188 = vadd.f32 %v186, %v187
      %v189 = vrot.slane %v188, 2
      %v190 = vadd.f32 %v188, %v189
      %v191 = vrot.slane %v190, 1
      %v192 = vadd.f32 %v190, %v191
      %v193 = vsel %vm185, %v154, 0.0
      %v194 = vrot.slane %v193, 4
      %v195 = vadd.f32 %v193, %v194
      %v196 = vrot.slane %v195, 2
      %v197 = vadd.f32 %v195, %v196
      %v198 = vrot.slane %v197, 1
      %v199 = vadd.f32 %v197, %v198
      %v200 = vsel %vm185, %v155, 0.0
      %v201 = vrot.slane %v200, 4
      %v202 = vadd.f32 %v200, %v201
      %v203 = vrot.slane %v202, 2
      %v204 = vadd.f32 %v202, %v203
      %v205 = vrot.slane %v204, 1
      %v206 = vadd.f32 %v204, %v205
      %v207 = vsel %vm185, %v156, 0.0
      %v208 = vrot.slane %v207, 4
      %v209 = vadd.f32 %v207, %v208
      %v210 = vrot.slane %v209, 2
      %v211 = vadd.f32 %v209, %v210
      %v212 = vrot.slane %v211, 1
      %v213 = vadd.f32 %v211, %v212
      %v214 = vsel %vm185, %v157, 0.0
      %v215 = vrot.slane %v214, 4
      %v216 = vadd.f32 %v214, %v215
      %v217 = vrot.slane %v216, 2
      %v218 = vadd.f32 %v216, %v217
      %v219 = vrot.slane %v218, 1
      %v220 = vadd.f32 %v218, %v219
      %v221 = vsel %vm185, %v158, 0.0
      %v222 = vrot.slane %v221, 4
      %v223 = vadd.f32 %v221, %v222
      %v224 = vrot.slane %v223, 2
      %v225 = vadd.f32 %v223, %v224
      %v226 = vrot.slane %v225, 1
      %v227 = vadd.f32 %v225, %v226
      %v228 = vsel %vm185, %v159, 0.0
      %v229 = vrot.slane %v228, 4
      %v230 = vadd.f32 %v228, %v229
      %v231 = vrot.slane %v230, 2
      %v232 = vadd.f32 %v230, %v231
      %v233 = vrot.slane %v232, 1
      %v234 = vadd.f32 %v232, %v233
      %v235 = vsel %vm185, %v160, 0.0
      %v236 = vrot.slane %v235, 4
      %v237 = vadd.f32 %v235, %v236
      %v238 = vrot.slane %v237, 2
      %v239 = vadd.f32 %v237, %v238
      %v240 = vrot.slane %v239, 1
      %v241 = vadd.f32 %v239, %v240
      %v242 = vsel %vm185, %v161, 0.0
      %v243 = vrot.slane %v242, 4
      %v244 = vadd.f32 %v242, %v243
      %v245 = vrot.slane %v244, 2
      %v246 = vadd.f32 %v244, %v245
      %v247 = vrot.slane %v246, 1
      %v248 = vadd.f32 %v246, %v247
      %v249 = vsel %vm185, %v162, 0.0
      %v250 = vrot.slane %v249, 4
      %v251 = vadd.f32 %v249, %v250
      %v252 = vrot.slane %v251, 2
      %v253 = vadd.f32 %v251, %v252
      %v254 = vrot.slane %v253, 1
      %v255 = vadd.f32 %v253, %v254
      %v256 = vsel %vm185, %v163, 0.0
      %v257 = vrot.slane %v256, 4
      %v258 = vadd.f32 %v256, %v257
      %v259 = vrot.slane %v258, 2
      %v260 = vadd.f32 %v258, %v259
      %v261 = vrot.slane %v260, 1
      %v262 = vadd.f32 %v260, %v261
      %v263 = vsel %vm185, %v164, 0.0
      %v264 = vrot.slane %v263, 4
      %v265 = vadd.f32 %v263, %v264
      %v266 = vrot.slane %v265, 2
      %v267 = vadd.f32 %v265, %v266
      %v268 = vrot.slane %v267, 1
      %v269 = vadd.f32 %v267, %v268
      %v270 = vsel %vm185, %v165, 0.0
      %v271 = vrot.slane %v270, 4
      %v272 = vadd.f32 %v270, %v271
      %v273 = vrot.slane %v272, 2
      %v274 = vadd.f32 %v272, %v273
      %v275 = vrot.slane %v274, 1
      %v276 = vadd.f32 %v274, %v275
      %v277 = vsel %vm185, %v166, 0.0
      %v278 = vrot.slane %v277, 4
      %v279 = vadd.f32 %v277, %v278
      %v280 = vrot.slane %v279, 2
      %v281 = vadd.f32 %v279, %v280
      %v282 = vrot.slane %v281, 1
      %v283 = vadd.f32 %v281, %v282
      %v284 = vsel %vm185, %v167, 0.0
      %v285 = vrot.slane %v284, 4
      %v286 = vadd.f32 %v284, %v285
      %v287 = vrot.slane %v286, 2
      %v288 = vadd.f32 %v286, %v287
      %v289 = vrot.slane %v288, 1
      %v290 = vadd.f32 %v288, %v289
      %v291 = vsel %vm185, %v168, 0.0
      %v292 = vrot.slane %v291, 4
      %v293 = vadd.f32 %v291, %v292
      %v294 = vrot.slane %v293, 2
      %v295 = vadd.f32 %v293, %v294
      %v296 = vrot.slane %v295, 1
      %v297 = vadd.f32 %v295, %v296
      %v298 = vsel %vm185, %v169, 0.0
      %v299 = vrot.slane %v298, 4
      %v300 = vadd.f32 %v298, %v299
      %v301 = vrot.slane %v300, 2
      %v302 = vadd.f32 %v300, %v301
      %v303 = vrot.slane %v302, 1
      %v304 = vadd.f32 %v302, %v303
      %v305 = vsel %vm185, %v170, 0.0
      %v306 = vrot.slane %v305, 4
      %v307 = vadd.f32 %v305, %v306
      %v308 = vrot.slane %v307, 2
      %v309 = vadd.f32 %v307, %v308
      %v310 = vrot.slane %v309, 1
      %v311 = vadd.f32 %v309, %v310
      %v312 = vsel %vm185, %v171, 0.0
      %v313 = vrot.slane %v312, 4
      %v314 = vadd.f32 %v312, %v313
      %v315 = vrot.slane %v314, 2
      %v316 = vadd.f32 %v314, %v315
      %v317 = vrot.slane %v316, 1
      %v318 = vadd.f32 %v316, %v317
      %v319 = vsel %vm185, %v172, 0.0
      %v320 = vrot.slane %v319, 4
      %v321 = vadd.f32 %v319, %v320
      %v322 = vrot.slane %v321, 2
      %v323 = vadd.f32 %v321, %v322
      %v324 = vrot.slane %v323, 1
      %v325 = vadd.f32 %v323, %v324
      %v326 = vsel %vm185, %v173, 0.0
      %v327 = vrot.slane %v326, 4
      %v328 = vadd.f32 %v326, %v327
      %v329 = vrot.slane %v328, 2
      %v330 = vadd.f32 %v328, %v329
      %v331 = vrot.slane %v330, 1
      %v332 = vadd.f32 %v330, %v331
      %v333 = vsel %vm185, %v174, 0.0
      %v334 = vrot.slane %v333, 4
      %v335 = vadd.f32 %v333, %v334
      %v336 = vrot.slane %v335, 2
      %v337 = vadd.f32 %v335, %v336
      %v338 = vrot.slane %v337, 1
      %v339 = vadd.f32 %v337, %v338
      %v340 = vsel %vm185, %v175, 0.0
      %v341 = vrot.slane %v340, 4
      %v342 = vadd.f32 %v340, %v341
      %v343 = vrot.slane %v342, 2
      %v344 = vadd.f32 %v342, %v343
      %v345 = vrot.slane %v344, 1
      %v346 = vadd.f32 %v344, %v345
      %v347 = vsel %vm185, %v176, 0.0
      %v348 = vrot.slane %v347, 4
      %v349 = vadd.f32 %v347, %v348
      %v350 = vrot.slane %v349, 2
      %v351 = vadd.f32 %v349, %v350
      %v352 = vrot.slane %v351, 1
      %v353 = vadd.f32 %v351, %v352
      %v354 = vsel %vm185, %v177, 0.0
      %v355 = vrot.slane %v354, 4
      %v356 = vadd.f32 %v354, %v355
      %v357 = vrot.slane %v356, 2
      %v358 = vadd.f32 %v356, %v357
      %v359 = vrot.slane %v358, 1
      %v360 = vadd.f32 %v358, %v359
      %v361 = vsel %vm185, %v178, 0.0
      %v362 = vrot.slane %v361, 4
      %v363 = vadd.f32 %v361, %v362
      %v364 = vrot.slane %v363, 2
      %v365 = vadd.f32 %v363, %v364
      %v366 = vrot.slane %v365, 1
      %v367 = vadd.f32 %v365, %v366
      %v368 = vsel %vm185, %v179, 0.0
      %v369 = vrot.slane %v368, 4
      %v370 = vadd.f32 %v368, %v369
      %v371 = vrot.slane %v370, 2
      %v372 = vadd.f32 %v370, %v371
      %v373 = vrot.slane %v372, 1
      %v374 = vadd.f32 %v372, %v373
      %v375 = vsel %vm185, %v180, 0.0
      %v376 = vrot.slane %v375, 4
      %v377 = vadd.f32 %v375, %v376
      %v378 = vrot.slane %v377, 2
      %v379 = vadd.f32 %v377, %v378
      %v380 = vrot.slane %v379, 1
      %v381 = vadd.f32 %v379, %v380
      %v382 = vsel %vm185, %v181, 0.0
      %v383 = vrot.slane %v382, 4
      %v384 = vadd.f32 %v382, %v383
      %v385 = vrot.slane %v384, 2
      %v386 = vadd.f32 %v384, %v385
      %v387 = vrot.slane %v386, 1
      %v388 = vadd.f32 %v386, %v387
      %v389 = vsel %vm185, %v182, 0.0
      %v390 = vrot.slane %v389, 4
      %v391 = vadd.f32 %v389, %v390
      %v392 = vrot.slane %v391, 2
      %v393 = vadd.f32 %v391, %v392
      %v394 = vrot.slane %v393, 1
      %v395 = vadd.f32 %v393, %v394
      %v396 = vsel %vm185, %v183, 0.0
      %v397 = vrot.slane %v396, 4
      %v398 = vadd.f32 %v396, %v397
      %v399 = vrot.slane %v398, 2
      %v400 = vadd.f32 %v398, %v399
      %v401 = vrot.slane %v400, 1
      %v402 = vadd.f32 %v400, %v401
      %v403 = vsel %vm185, %v184, 0.0
      %v404 = vrot.slane %v403, 4
      %v405 = vadd.f32 %v403, %v404
      %v406 = vrot.slane %v405, 2
      %v407 = vadd.f32 %v405, %v406
      %v408 = vrot.slane %v407, 1
      %v409 = vadd.f32 %v407, %v408
      %vm442 = vcmask 1041409
      %v443 = vsel %vm442, %v199, %v192
      %vm444 = vcmask 1042434
      %v445 = vsel %vm444, %v206, %v443
      %vm446 = vcmask 1043459
      %v447 = vsel %vm446, %v213, %v445
      %vm448 = vcmask 1044484
      %v449 = vsel %vm448, %v220, %v447
      %vm450 = vcmask 1045509
      %v451 = vsel %vm450, %v227, %v449
      %vm452 = vcmask 1046534
      %v453 = vsel %vm452, %v234, %v451
      %vm454 = vcmask 1047559
      %v455 = vsel %vm454, %v241, %v453
      %v456 = vsel %vm442, %v255, %v248
      %v457 = vsel %vm444, %v262, %v456
      %v458 = vsel %vm446, %v269, %v457
      %v459 = vsel %vm448, %v276, %v458
      %v460 = vsel %vm450, %v283, %v459
      %v461 = vsel %vm452, %v290, %v460
      %v462 = vsel %vm454, %v297, %v461
      %v463 = vsel %vm442, %v311, %v304
      %v464 = vsel %vm444, %v318, %v463
      %v465 = vsel %vm446, %v325, %v464
      %v466 = vsel %vm448, %v332, %v465
      %v467 = vsel %vm450, %v339, %v466
      %v468 = vsel %vm452, %v346, %v467
      %v469 = vsel %vm454, %v353, %v468
      %v470 = vsel %vm442, %v367, %v360
      %v471 = vsel %vm444, %v374, %v470
      %v472 = vsel %vm446, %v381, %v471
      %v473 = vsel %vm448, %v388, %v472
      %v474 = vsel %vm450, %v395, %v473
      %v475 = vsel %vm452, %v402, %v474
      %v476 = vsel %vm454, %v409, %v475
      %v481 = vadd.f32 %v149, %v455
      %v482 = vadd.f32 %v150, %v462
      %v483 = vadd.f32 %v151, %v469
      %v484 = vadd.f32 %v152, %v476
      %485 = vst.msk [vmem:[%s139] sm:$0xff] %vm185, %v481
      %486 = vst.msk [vmem:[%s139 + $0x8] sm:$0xff] %vm185, %v482
      %487 = vst.msk [vmem:[%s139 + $0x10] sm:$0xff] %vm185, %v483
      %488 = vst.msk [vmem:[%s139 + $0x18] sm:$0xff] %vm185, %v484
      %p489 = scmp.lt.s32.totalorder %s16, 1
      %s490 = scalar_select %p489, %s16, 1
      %s491 = smul.addr %s490, 4
      %s492 = smul.addr %s491, 8
      %s493 = scalar_lea.vmem %s1, %s492
      // Predicated region
      $region29: #{cbam3d_forward.3} parent=23 // pred_check
        %p494 = pneg %p70
      $region30: #{cbam3d_forward.3} parent=23 // pred_check_branch
        %496 = sbr.rel (%p494) target = $region32
      $region31: #{cbam3d_forward.3} parent=23 // pred_region
        _
      $region32: #{cbam3d_forward.3} parent=23 // pred_fallthru
        _
    $region24: #{cbam3d_forward.3} parent=5 // pred_fallthru
      _
    %p497 = scmp.le.s32.totalorder 2, %s7
    // Predicated region
    $region33: #{cbam3d_forward.3} parent=5 // pred_check
      %p498 = pneg %p497
    $region34: #{cbam3d_forward.3} parent=5 // pred_check_branch
      %500 = sbr.rel (%p498) target = $region36
    $region35: #{cbam3d_forward.3} parent=5 // pred_region
      %s501 = ssub.s32 %s7, 2
      // Predicated region
      $region37: #{cbam3d_forward.3} parent=35 // pred_check
        %p502 = pneg %p76
      $region38: #{cbam3d_forward.3} parent=35 // pred_check_branch
        %504 = sbr.rel (%p502) target = $region40
      $region39: #{cbam3d_forward.3} parent=35 // pred_region
        %p505 = scmp.lt.s32.totalorder %s18, 1
        %s506 = scalar_select %p505, %s18, 1
        %s507 = smul.addr %s506, 4
        %s508 = smul.addr %s507, 8
        %s509 = scalar_lea.vmem %s1, %s508
      $region40: #{cbam3d_forward.3} parent=35 // pred_fallthru
        _
    $region36: #{cbam3d_forward.3} parent=5 // pred_fallthru
      _
  $region6: #{cbam3d_forward.3} parent=0 // loop_footer
    %s11 = sadd.s32 1, %s7
  $region7: #{cbam3d_forward.3} parent=0 // loop_footer_branch
    %6 = sbr.rel target = $region3
  $region8: #{cbam3d_forward.3} parent=0 // loop_exit
    _

// kernel: cbam3d_forward.4
$region0: #{cbam3d_forward.4}
  #allocation0 [shape = 'u32[]', space=smem, size = 0x4, offset = 0x4, fixed_abs, tag = 'smem constant byte address 0x4 - core index']
  #allocation1 [shape = 'u32[144,128]{1,0:T(1,128)}', space=vmem, size = 0x12000, scoped, tag = 'internal scratch']
  %s0 = inlined_call_operand.vmem [shape: f32[2,32,8,64], index: 0, kind: input, shape index: {}]
  %s1 = inlined_call_operand.vmem [shape: f32[2,32,1,64], index: 1, kind: input, shape index: {}]
  %s2 = inlined_call_operand.vmem [shape: f32[2,8,128], index: 2, kind: output, shape index: {}]
  %s3 = sld [smem:[#allocation0]]
  $region41: #{cbam3d_forward.4} parent=0
    _
  %s5 = ssub.s32 1, %s3
  %s6 = scalar_select 0, %s5, %s3
  loop: start=0, step=1, limit=4
  $region2: #{cbam3d_forward.4} parent=0 // loop_pre_header
    _
  $region3: #{cbam3d_forward.4} parent=0 // loop_header
    %s8 = sphi 0, %s12
    %p9 = scmp.ge.s32.totalorder %s8, 4
    %s15 = sphi 0, %s27
    %s16 = sphi 0, %s23
    %s17 = sphi 0, %s15
    %s18 = sphi 0, %s16
    %s19 = sphi 0, %s17
    %s20 = sphi 0, %s18
    %s32 = sphi 0, %s34
    %s35 = sphi 0, %s32
    %s36 = sphi 0, %s35
    %s52 = sphi 0, %s36
    %s58 = sphi 0, %s60
    %s61 = sphi 0, %s58
    %s62 = sphi 0, %s61
    %s78 = sphi 0, %s62
    %s86 = sphi 0, %s88
    %s89 = sphi 0, %s86
    %s90 = sphi 0, %s89
    %s106 = sphi 0, %s90
  $region4: #{cbam3d_forward.4} parent=0 // loop_header_branch
    %11 = sbr.rel (%p9) target = $region8
  $region5: #{cbam3d_forward.4} parent=0 // loop_body
    %s13 = ssub.s32 %s8, 1
    %s14 = ssub.s32 %s8, 2
    %s21 = sadd.s32 1, %s16
    %p22 = scmp.ge.s32.totalorder %s21, 1
    %s23 = scalar_select %p22, 0, %s21
    %s24 = sadd.s32 1, %s15
    %s25 = scalar_select %p22, %s24, %s15
    %p26 = scmp.ge.s32.totalorder %s25, 2
    %s27 = scalar_select %p26, 0, %s25
    %s28 = ssub.s32 %s15, %s27
    %s29 = ssub.s32 %s16, %s23
    %s30 = sor.u32 %s28, %s29
    %p31 = scmp.eq.s32.totalorder %s30, 0
    %s33 = sadd.s32 %s32, 1
    %s34 = scalar_select %p31, %s32, %s33
    %p37 = pneg %p31
    %p38 = scmp.eq.s32.totalorder %s8, 1
    %p39 = por %p37, %p38
    %p40 = scmp.ne.s32.totalorder %s32, %s35
    %p41 = scmp.eq.s32.totalorder %s8, 0
    %p42 = por %p40, %p41
    %p43 = scmp.ne.s32.totalorder %s32, %s35
    %p44 = scmp.eq.s32.totalorder %s13, 1
    %p45 = por %p43, %p44
    %p46 = scmp.ne.s32.totalorder %s35, %s36
    %p47 = scmp.eq.s32.totalorder %s13, 0
    %p48 = por %p46, %p47
    %p49 = scmp.ne.s32.totalorder %s35, %s36
    %p50 = scmp.eq.s32.totalorder %s14, 1
    %p51 = por %p49, %p50
    %p53 = scmp.ne.s32.totalorder %s36, %s52
    %p54 = scmp.eq.s32.totalorder %s14, 0
    %p55 = por %p53, %p54
    %s56 = ssub.s32 %s15, %s27
    %p57 = scmp.eq.s32.totalorder %s56, 0
    %s59 = sadd.s32 %s58, 1
    %s60 = scalar_select %p57, %s58, %s59
    %p63 = pneg %p57
    %p64 = scmp.eq.s32.totalorder %s8, 1
    %p65 = por %p63, %p64
    %p66 = scmp.ne.s32.totalorder %s58, %s61
    %p67 = scmp.eq.s32.totalorder %s8, 0
    %p68 = por %p66, %p67
    %p69 = scmp.ne.s32.totalorder %s58, %s61
    %p70 = scmp.eq.s32.totalorder %s13, 1
    %p71 = por %p69, %p70
    %p72 = scmp.ne.s32.totalorder %s61, %s62
    %p73 = scmp.eq.s32.totalorder %s13, 0
    %p74 = por %p72, %p73
    %p75 = scmp.ne.s32.totalorder %s61, %s62
    %p76 = scmp.eq.s32.totalorder %s14, 1
    %p77 = por %p75, %p76
    %p79 = scmp.ne.s32.totalorder %s62, %s78
    %p80 = scmp.eq.s32.totalorder %s14, 0
    %p81 = por %p79, %p80
    %s82 = ssub.s32 %s15, %s27
    %s83 = ssub.s32 %s16, %s23
    %s84 = sor.u32 %s82, %s83
    %p85 = scmp.eq.s32.totalorder %s84, 0
    %s87 = sadd.s32 %s86, 1
    %s88 = scalar_select %p85, %s86, %s87
    %p91 = pneg %p85
    %p92 = scmp.eq.s32.totalorder %s8, 1
    %p93 = por %p91, %p92
    %p94 = scmp.ne.s32.totalorder %s86, %s89
    %p95 = scmp.eq.s32.totalorder %s8, 0
    %p96 = por %p94, %p95
    %p97 = scmp.ne.s32.totalorder %s86, %s89
    %p98 = scmp.eq.s32.totalorder %s13, 1
    %p99 = por %p97, %p98
    %p100 = scmp.ne.s32.totalorder %s89, %s90
    %p101 = scmp.eq.s32.totalorder %s13, 0
    %p102 = por %p100, %p101
    %p103 = scmp.ne.s32.totalorder %s89, %s90
    %p104 = scmp.eq.s32.totalorder %s14, 1
    %p105 = por %p103, %p104
    %p107 = scmp.ne.s32.totalorder %s90, %s106
    %p108 = scmp.eq.s32.totalorder %s14, 0
    %p109 = por %p107, %p108
    %p110 = scmp.le.s32.totalorder 1, %s8
    %p111 = scmp.lt.s32.totalorder %s8, 3
    %p112 = pnand %p110, %p111
    %p113 = pneg %p112
    // Predicated region
    $region9: #{cbam3d_forward.4} parent=5 // pred_check
      _
    $region10: #{cbam3d_forward.4} parent=5 // pred_check_branch
      %115 = sbr.rel (%p112) target = $region12
    $region11: #{cbam3d_forward.4} parent=5 // pred_region
      %s116 = ssub.s32 %s8, 1
    $region12: #{cbam3d_forward.4} parent=5 // pred_fallthru
      _
    %p117 = scmp.lt.s32.totalorder %s8, 2
    // Predicated region
    $region13: #{cbam3d_forward.4} parent=5 // pred_check
      %p118 = pneg %p117
    $region14: #{cbam3d_forward.4} parent=5 // pred_check_branch
      %120 = sbr.rel (%p118) target = $region16
    $region15: #{cbam3d_forward.4} parent=5 // pred_region
      // Predicated region
      $region17: #{cbam3d_forward.4} parent=15 // pred_check
        %p121 = pneg %p42
      $region18: #{cbam3d_forward.4} parent=15 // pred_check_branch
        %123 = sbr.rel (%p121) target = $region20
      $region19: #{cbam3d_forward.4} parent=15 // pred_region
        %p124 = scmp.lt.s32.totalorder %s15, 1
        %s125 = scalar_select %p124, %s15, 1
        %p126 = scmp.lt.s32.totalorder %s16, 0
        %s127 = scalar_select %p126, %s16, 0
        %s128 = smul.addr %s125, 32
        %s129 = sadd.s32 %s127, %s128
        %s130 = smul.addr %s129, 8
        %s131 = scalar_lea.vmem %s0, %s130
      $region20: #{cbam3d_forward.4} parent=15 // pred_fallthru
        _
      // Predicated region
      $region21: #{cbam3d_forward.4} parent=15 // pred_check
        %p132 = pneg %p68
      $region22: #{cbam3d_forward.4} parent=15 // pred_check_branch
        %134 = sbr.rel (%p132) target = $region24
      $region23: #{cbam3d_forward.4} parent=15 // pred_region
        %p135 = scmp.lt.s32.totalorder %s15, 1
        %s136 = scalar_select %p135, %s15, 1
        %s137 = smul.addr %s136, 32
        %s138 = scalar_lea.vmem %s1, %s137
      $region24: #{cbam3d_forward.4} parent=15 // pred_fallthru
        _
    $region16: #{cbam3d_forward.4} parent=5 // pred_fallthru
      _
    %p139 = scmp.le.s32.totalorder 1, %s8
    %p140 = scmp.lt.s32.totalorder %s8, 3
    %p141 = pnand %p139, %p140
    %p142 = pneg %p141
    // Predicated region
    $region25: #{cbam3d_forward.4} parent=5 // pred_check
      _
    $region26: #{cbam3d_forward.4} parent=5 // pred_check_branch
      %144 = sbr.rel (%p141) target = $region28
    $region27: #{cbam3d_forward.4} parent=5 // pred_region
      %s145 = ssub.s32 %s8, 1
      %p146 = scmp.lt.s32.totalorder %s17, 1
      %s147 = scalar_select %p146, %s17, 1
      %p148 = scmp.lt.s32.totalorder %s18, 0
      %s149 = scalar_select %p148, %s18, 0
      %s150 = smul.addr %s147, 32
      %s151 = sadd.s32 %s149, %s150
      %s152 = smul.addr %s151, 8
      %s153 = scalar_lea.vmem %s0, %s152
      %p154 = pneg %p48
      %p155 = pneg %p45
      %p156 = scmp.lt.s32.totalorder %s17, 1
      %s157 = scalar_select %p156, %s17, 1
      %s158 = smul.addr %s157, 32
      %s159 = scalar_lea.vmem %s1, %s158
      %p160 = pneg %p74
      %p161 = pneg %p71
      %p162 = pneg %p102
      %p163 = pneg %p99
      %p164 = scmp.lt.s32.totalorder %s17, 1
      %s165 = scalar_select %p164, %s17, 1
      %p166 = scmp.lt.s32.totalorder %s18, 0
      %s167 = scalar_select %p166, %s18, 0
      %s168 = sadd.s32 %s167, %s165
      %s169 = smul.addr %s168, 8
      %s170 = scalar_lea.vmem %s2, %s169
      %p171 = scmp.lt.s32.totalorder %s17, 1
      %s172 = scalar_select %p171, %s17, 1
      %p173 = scmp.lt.s32.totalorder %s18, 0
      %s174 = scalar_select %p173, %s18, 0
      %s175 = smul.addr %s172, 32
      %s176 = sadd.s32 %s174, %s175
      %s177 = smul.addr %s176, 8
      %s178 = scalar_lea.vmem %s0, %s177
      %p179 = scmp.lt.s32.totalorder %s17, 1
      %s180 = scalar_select %p179, %s17, 1
      %s181 = smul.addr %s180, 32
      %s182 = scalar_lea.vmem %s1, %s181
      %p183 = scmp.lt.s32.totalorder %s17, 1
      %s184 = scalar_select %p183, %s17, 1
      %p185 = scmp.lt.s32.totalorder %s18, 0
      %s186 = scalar_select %p185, %s18, 0
      %s187 = sadd.s32 %s186, %s184
      %s188 = smul.addr %s187, 8
      %s189 = scalar_lea.vmem %s2, %s188
      %v190 = vld [vmem:[%s178] sm:$0xff]
      %v191 = vld [vmem:[%s178 + $0x8] sm:$0xff]
      %v192 = vld [vmem:[%s178 + $0x10] sm:$0xff]
      %v193 = vld [vmem:[%s178 + $0x18] sm:$0xff]
      %v194 = vld [vmem:[%s178 + $0x20] sm:$0xff]
      %v195 = vld [vmem:[%s178 + $0x28] sm:$0xff]
      %v196 = vld [vmem:[%s178 + $0x30] sm:$0xff]
      %v197 = vld [vmem:[%s178 + $0x38] sm:$0xff]
      %v198 = vld [vmem:[%s178 + $0x40] sm:$0xff]
      %v199 = vld [vmem:[%s178 + $0x48] sm:$0xff]
      %v200 = vld [vmem:[%s178 + $0x50] sm:$0xff]
      %v201 = vld [vmem:[%s178 + $0x58] sm:$0xff]
      %v202 = vld [vmem:[%s178 + $0x60] sm:$0xff]
      %v203 = vld [vmem:[%s178 + $0x68] sm:$0xff]
      %v204 = vld [vmem:[%s178 + $0x70] sm:$0xff]
      %v205 = vld [vmem:[%s178 + $0x78] sm:$0xff]
      %v206 = vld [vmem:[%s178 + $0x80] sm:$0xff]
      %v207 = vld [vmem:[%s178 + $0x88] sm:$0xff]
      %v208 = vld [vmem:[%s178 + $0x90] sm:$0xff]
      %v209 = vld [vmem:[%s178 + $0x98] sm:$0xff]
      %v210 = vld [vmem:[%s178 + $0xa0] sm:$0xff]
      %v211 = vld [vmem:[%s178 + $0xa8] sm:$0xff]
      %v212 = vld [vmem:[%s178 + $0xb0] sm:$0xff]
      %v213 = vld [vmem:[%s178 + $0xb8] sm:$0xff]
      %v214 = vld [vmem:[%s178 + $0xc0] sm:$0xff]
      %v215 = vld [vmem:[%s178 + $0xc8] sm:$0xff]
      %v216 = vld [vmem:[%s178 + $0xd0] sm:$0xff]
      %v217 = vld [vmem:[%s178 + $0xd8] sm:$0xff]
      %v218 = vld [vmem:[%s178 + $0xe0] sm:$0xff]
      %v219 = vld [vmem:[%s178 + $0xe8] sm:$0xff]
      %v220 = vld [vmem:[%s178 + $0xf0] sm:$0xff]
      %v221 = vld [vmem:[%s178 + $0xf8] sm:$0xff]
      %v222 = vld [vmem:[%s182] sm:$0x1]
      %v223 = vld [vmem:[%s182 + $0x1] sm:$0x1]
      %v224 = vld [vmem:[%s182 + $0x2] sm:$0x1]
      %v225 = vld [vmem:[%s182 + $0x3] sm:$0x1]
      %v226 = vld [vmem:[%s182 + $0x4] sm:$0x1]
      %v227 = vld [vmem:[%s182 + $0x5] sm:$0x1]
      %v228 = vld [vmem:[%s182 + $0x6] sm:$0x1]
      %v229 = vld [vmem:[%s182 + $0x7] sm:$0x1]
      %v230 = vld [vmem:[%s182 + $0x8] sm:$0x1]
      %v231 = vld [vmem:[%s182 + $0x9] sm:$0x1]
      %v232 = vld [vmem:[%s182 + $0xa] sm:$0x1]
      %v233 = vld [vmem:[%s182 + $0xb] sm:$0x1]
      %v234 = vld [vmem:[%s182 + $0xc] sm:$0x1]
      %v235 = vld [vmem:[%s182 + $0xd] sm:$0x1]
      %v236 = vld [vmem:[%s182 + $0xe] sm:$0x1]
      %v237 = vld [vmem:[%s182 + $0xf] sm:$0x1]
      %v238 = vld [vmem:[%s182 + $0x10] sm:$0x1]
      %v239 = vld [vmem:[%s182 + $0x11] sm:$0x1]
      %v240 = vld [vmem:[%s182 + $0x12] sm:$0x1]
      %v241 = vld [vmem:[%s182 + $0x13] sm:$0x1]
      %v242 = vld [vmem:[%s182 + $0x14] sm:$0x1]
      %v243 = vld [vmem:[%s182 + $0x15] sm:$0x1]
      %v244 = vld [vmem:[%s182 + $0x16] sm:$0x1]
      %v245 = vld [vmem:[%s182 + $0x17] sm:$0x1]
      %v246 = vld [vmem:[%s182 + $0x18] sm:$0x1]
      %v247 = vld [vmem:[%s182 + $0x19] sm:$0x1]
      %v248 = vld [vmem:[%s182 + $0x1a] sm:$0x1]
      %v249 = vld [vmem:[%s182 + $0x1b] sm:$0x1]
      %v250 = vld [vmem:[%s182 + $0x1c] sm:$0x1]
      %v251 = vld [vmem:[%s182 + $0x1d] sm:$0x1]
      %v252 = vld [vmem:[%s182 + $0x1e] sm:$0x1]
      %v253 = vld [vmem:[%s182 + $0x1f] sm:$0x1]
      %v286 = vlaneseq
      %v287 = vshrl.u32 %v286, 7
      %v288 = vsub.s32 0, %v287
      %v289 = vrot.slane %v222, %v288
      %v290 = vlaneseq
      %v291 = vshrl.u32 %v290, 7
      %v292 = vsub.s32 0, %v291
      %v293 = vrot.slane %v223, %v292
      %v294 = vlaneseq
      %v295 = vshrl.u32 %v294, 7
      %v296 = vsub.s32 0, %v295
      %v297 = vrot.slane %v224, %v296
      %v298 = vlaneseq
      %v299 = vshrl.u32 %v298, 7
      %v300 = vsub.s32 0, %v299
      %v301 = vrot.slane %v225, %v300
      %v302 = vlaneseq
      %v303 = vshrl.u32 %v302, 7
      %v304 = vsub.s32 0, %v303
      %v305 = vrot.slane %v226, %v304
      %v306 = vlaneseq
      %v307 = vshrl.u32 %v306, 7
      %v308 = vsub.s32 0, %v307
      %v309 = vrot.slane %v227, %v308
      %v310 = vlaneseq
      %v311 = vshrl.u32 %v310, 7
      %v312 = vsub.s32 0, %v311
      %v313 = vrot.slane %v228, %v312
      %v314 = vlaneseq
      %v315 = vshrl.u32 %v314, 7
      %v316 = vsub.s32 0, %v315
      %v317 = vrot.slane %v229, %v316
      %v318 = vlaneseq
      %v319 = vshrl.u32 %v318, 7
      %v320 = vsub.s32 0, %v319
      %v321 = vrot.slane %v230, %v320
      %v322 = vlaneseq
      %v323 = vshrl.u32 %v322, 7
      %v324 = vsub.s32 0, %v323
      %v325 = vrot.slane %v231, %v324
      %v326 = vlaneseq
      %v327 = vshrl.u32 %v326, 7
      %v328 = vsub.s32 0, %v327
      %v329 = vrot.slane %v232, %v328
      %v330 = vlaneseq
      %v331 = vshrl.u32 %v330, 7
      %v332 = vsub.s32 0, %v331
      %v333 = vrot.slane %v233, %v332
      %v334 = vlaneseq
      %v335 = vshrl.u32 %v334, 7
      %v336 = vsub.s32 0, %v335
      %v337 = vrot.slane %v234, %v336
      %v338 = vlaneseq
      %v339 = vshrl.u32 %v338, 7
      %v340 = vsub.s32 0, %v339
      %v341 = vrot.slane %v235, %v340
      %v342 = vlaneseq
      %v343 = vshrl.u32 %v342, 7
      %v344 = vsub.s32 0, %v343
      %v345 = vrot.slane %v236, %v344
      %v346 = vlaneseq
      %v347 = vshrl.u32 %v346, 7
      %v348 = vsub.s32 0, %v347
      %v349 = vrot.slane %v237, %v348
      %v350 = vlaneseq
      %v351 = vshrl.u32 %v350, 7
      %v352 = vsub.s32 0, %v351
      %v353 = vrot.slane %v238, %v352
      %v354 = vlaneseq
      %v355 = vshrl.u32 %v354, 7
      %v356 = vsub.s32 0, %v355
      %v357 = vrot.slane %v239, %v356
      %v358 = vlaneseq
      %v359 = vshrl.u32 %v358, 7
      %v360 = vsub.s32 0, %v359
      %v361 = vrot.slane %v240, %v360
      %v362 = vlaneseq
      %v363 = vshrl.u32 %v362, 7
      %v364 = vsub.s32 0, %v363
      %v365 = vrot.slane %v241, %v364
      %v366 = vlaneseq
      %v367 = vshrl.u32 %v366, 7
      %v368 = vsub.s32 0, %v367
      %v369 = vrot.slane %v242, %v368
      %v370 = vlaneseq
      %v371 = vshrl.u32 %v370, 7
      %v372 = vsub.s32 0, %v371
      %v373 = vrot.slane %v243, %v372
      %v374 = vlaneseq
      %v375 = vshrl.u32 %v374, 7
      %v376 = vsub.s32 0, %v375
      %v377 = vrot.slane %v244, %v376
      %v378 = vlaneseq
      %v379 = vshrl.u32 %v378, 7
      %v380 = vsub.s32 0, %v379
      %v381 = vrot.slane %v245, %v380
      %v382 = vlaneseq
      %v383 = vshrl.u32 %v382, 7
      %v384 = vsub.s32 0, %v383
      %v385 = vrot.slane %v246, %v384
      %v386 = vlaneseq
      %v387 = vshrl.u32 %v386, 7
      %v388 = vsub.s32 0, %v387
      %v389 = vrot.slane %v247, %v388
      %v390 = vlaneseq
      %v391 = vshrl.u32 %v390, 7
      %v392 = vsub.s32 0, %v391
      %v393 = vrot.slane %v248, %v392
      %v394 = vlaneseq
      %v395 = vshrl.u32 %v394, 7
      %v396 = vsub.s32 0, %v395
      %v397 = vrot.slane %v249, %v396
      %v398 = vlaneseq
      %v399 = vshrl.u32 %v398, 7
      %v400 = vsub.s32 0, %v399
      %v401 = vrot.slane %v250, %v400
      %v402 = vlaneseq
      %v403 = vshrl.u32 %v402, 7
      %v404 = vsub.s32 0, %v403
      %v405 = vrot.slane %v251, %v404
      %v406 = vlaneseq
      %v407 = vshrl.u32 %v406, 7
      %v408 = vsub.s32 0, %v407
      %v409 = vrot.slane %v252, %v408
      %v410 = vlaneseq
      %v411 = vshrl.u32 %v410, 7
      %v412 = vsub.s32 0, %v411
      %v413 = vrot.slane %v253, %v412
      %v446 = vmul.f32 %v190, %v289
      %v447 = vmul.f32 %v191, %v293
      %v448 = vmul.f32 %v192, %v297
      %v449 = vmul.f32 %v193, %v301
      %v450 = vmul.f32 %v194, %v305
      %v451 = vmul.f32 %v195, %v309
      %v452 = vmul.f32 %v196, %v313
      %v453 = vmul.f32 %v197, %v317
      %v454 = vmul.f32 %v198, %v321
      %v455 = vmul.f32 %v199, %v325
      %v456 = vmul.f32 %v200, %v329
      %v457 = vmul.f32 %v201, %v333
      %v458 = vmul.f32 %v202, %v337
      %v459 = vmul.f32 %v203, %v341
      %v460 = vmul.f32 %v204, %v345
      %v461 = vmul.f32 %v205, %v349
      %v462 = vmul.f32 %v206, %v353
      %v463 = vmul.f32 %v207, %v357
      %v464 = vmul.f32 %v208, %v361
      %v465 = vmul.f32 %v209, %v365
      %v466 = vmul.f32 %v210, %v369
      %v467 = vmul.f32 %v211, %v373
      %v468 = vmul.f32 %v212, %v377
      %v469 = vmul.f32 %v213, %v381
      %v470 = vmul.f32 %v214, %v385
      %v471 = vmul.f32 %v215, %v389
      %v472 = vmul.f32 %v216, %v393
      %v473 = vmul.f32 %v217, %v397
      %v474 = vmul.f32 %v218, %v401
      %v475 = vmul.f32 %v219, %v405
      %v476 = vmul.f32 %v220, %v409
      %v477 = vmul.f32 %v221, %v413
      %vm478 = vcmask 523264
      %v479 = vsel %vm478, %v446, -inf
      %v480 = vsel %vm478, %v447, -inf
      %v481 = vsel %vm478, %v448, -inf
      %v482 = vsel %vm478, %v449, -inf
      %v483 = vsel %vm478, %v450, -inf
      %v484 = vmax.f32 %v479, %v483
      %v485 = vsel %vm478, %v451, -inf
      %v486 = vmax.f32 %v480, %v485
      %v487 = vsel %vm478, %v452, -inf
      %v488 = vmax.f32 %v481, %v487
      %v489 = vsel %vm478, %v453, -inf
      %v490 = vmax.f32 %v482, %v489
      %v491 = vsel %vm478, %v454, -inf
      %v492 = vmax.f32 %v484, %v491
      %v493 = vsel %vm478, %v455, -inf
      %v494 = vmax.f32 %v486, %v493
      %v495 = vsel %vm478, %v456, -inf
      %v496 = vmax.f32 %v488, %v495
      %v497 = vsel %vm478, %v457, -inf
      %v498 = vmax.f32 %v490, %v497
      %v499 = vsel %vm478, %v458, -inf
      %v500 = vmax.f32 %v492, %v499
      %v501 = vsel %vm478, %v459, -inf
      %v502 = vmax.f32 %v494, %v501
      %v503 = vsel %vm478, %v460, -inf
      %v504 = vmax.f32 %v496, %v503
      %v505 = vsel %vm478, %v461, -inf
      %v506 = vmax.f32 %v498, %v505
      %v507 = vsel %vm478, %v462, -inf
      %v508 = vmax.f32 %v500, %v507
      %v509 = vsel %vm478, %v463, -inf
      %v510 = vmax.f32 %v502, %v509
      %v511 = vsel %vm478, %v464, -inf
      %v512 = vmax.f32 %v504, %v511
      %v513 = vsel %vm478, %v465, -inf
      %v514 = vmax.f32 %v506, %v513
      %v515 = vsel %vm478, %v466, -inf
      %v516 = vmax.f32 %v508, %v515
      %v517 = vsel %vm478, %v467, -inf
      %v518 = vmax.f32 %v510, %v517
      %v519 = vsel %vm478, %v468, -inf
      %v520 = vmax.f32 %v512, %v519
      %v521 = vsel %vm478, %v469, -inf
      %v522 = vmax.f32 %v514, %v521
      %v523 = vsel %vm478, %v470, -inf
      %v524 = vmax.f32 %v516, %v523
      %v525 = vsel %vm478, %v471, -inf
      %v526 = vmax.f32 %v518, %v525
      %v527 = vsel %vm478, %v472, -inf
      %v528 = vmax.f32 %v520, %v527
      %v529 = vsel %vm478, %v473, -inf
      %v530 = vmax.f32 %v522, %v529
      %v531 = vsel %vm478, %v474, -inf
      %v532 = vmax.f32 %v524, %v531
      %v533 = vsel %vm478, %v475, -inf
      %v534 = vmax.f32 %v526, %v533
      %v535 = vsel %vm478, %v476, -inf
      %v536 = vmax.f32 %v528, %v535
      %v537 = vsel %vm478, %v477, -inf
      %v538 = vmax.f32 %v530, %v537
      %v539 = vmax.f32 %v532, %v534
      %v540 = vmax.f32 %v536, %v538
      %v541 = vmax.f32 %v539, %v540
      %v542 = vsel %vm478, %v446, 0.0
      %v543 = vsel %vm478, %v447, 0.0
      %v544 = vadd.f32 %v542, %v543
      %v545 = vsel %vm478, %v448, 0.0
      %v546 = vadd.f32 %v544, %v545
      %v547 = vsel %vm478, %v449, 0.0
      %v548 = vadd.f32 %v546, %v547
      %v549 = vsel %vm478, %v450, 0.0
      %v550 = vadd.f32 %v548, %v549
      %v551 = vsel %vm478, %v451, 0.0
      %v552 = vadd.f32 %v550, %v551
      %v553 = vsel %vm478, %v452, 0.0
      %v554 = vadd.f32 %v552, %v553
      %v555 = vsel %vm478, %v453, 0.0
      %v556 = vadd.f32 %v554, %v555
      %v557 = vsel %vm478, %v454, 0.0
      %v558 = vadd.f32 %v556, %v557
      %v559 = vsel %vm478, %v455, 0.0
      %v560 = vadd.f32 %v558, %v559
      %v561 = vsel %vm478, %v456, 0.0
      %v562 = vadd.f32 %v560, %v561
      %v563 = vsel %vm478, %v457, 0.0
      %v564 = vadd.f32 %v562, %v563
      %v565 = vsel %vm478, %v458, 0.0
      %v566 = vadd.f32 %v564, %v565
      %v567 = vsel %vm478, %v459, 0.0
      %v568 = vadd.f32 %v566, %v567
      %v569 = vsel %vm478, %v460, 0.0
      %v570 = vadd.f32 %v568, %v569
      %v571 = vsel %vm478, %v461, 0.0
      %v572 = vadd.f32 %v570, %v571
      %v573 = vsel %vm478, %v462, 0.0
      %v574 = vadd.f32 %v572, %v573
      %v575 = vsel %vm478, %v463, 0.0
      %v576 = vadd.f32 %v574, %v575
      %v577 = vsel %vm478, %v464, 0.0
      %v578 = vadd.f32 %v576, %v577
      %v579 = vsel %vm478, %v465, 0.0
      %v580 = vadd.f32 %v578, %v579
      %v581 = vsel %vm478, %v466, 0.0
      %v582 = vadd.f32 %v580, %v581
      %v583 = vsel %vm478, %v467, 0.0
      %v584 = vadd.f32 %v582, %v583
      %v585 = vsel %vm478, %v468, 0.0
      %v586 = vadd.f32 %v584, %v585
      %v587 = vsel %vm478, %v469, 0.0
      %v588 = vadd.f32 %v586, %v587
      %v589 = vsel %vm478, %v470, 0.0
      %v590 = vadd.f32 %v588, %v589
      %v591 = vsel %vm478, %v471, 0.0
      %v592 = vadd.f32 %v590, %v591
      %v593 = vsel %vm478, %v472, 0.0
      %v594 = vadd.f32 %v592, %v593
      %v595 = vsel %vm478, %v473, 0.0
      %v596 = vadd.f32 %v594, %v595
      %v597 = vsel %vm478, %v474, 0.0
      %v598 = vadd.f32 %v596, %v597
      %v599 = vsel %vm478, %v475, 0.0
      %v600 = vadd.f32 %v598, %v599
      %v601 = vsel %vm478, %v476, 0.0
      %v602 = vadd.f32 %v600, %v601
      %v603 = vsel %vm478, %v477, 0.0
      %v604 = vadd.f32 %v602, %v603
      %v605 = vrcp.pop 32.0
      %v606 = vmul.f32 %v604, %v605
      %608 = vrot.lane.b32.xlu0 %v606, 64
      %v609 = vpop.permute.xlu0 %608
      %v611 = vsel %vm478, %v541, %v609
      %612 = vst [vmem:[%s189] sm:$0xff] %v611
      %p613 = scmp.lt.s32.totalorder %s17, 1
      %s614 = scalar_select %p613, %s17, 1
      %p615 = scmp.lt.s32.totalorder %s18, 0
      %s616 = scalar_select %p615, %s18, 0
      %s617 = sadd.s32 %s616, %s614
      %s618 = smul.addr %s617, 8
      %s619 = scalar_lea.vmem %s2, %s618
      // Predicated region
      $region29: #{cbam3d_forward.4} parent=27 // pred_check
        %p620 = pneg %p99
      $region30: #{cbam3d_forward.4} parent=27 // pred_check_branch
        %622 = sbr.rel (%p620) target = $region32
      $region31: #{cbam3d_forward.4} parent=27 // pred_region
        _
      $region32: #{cbam3d_forward.4} parent=27 // pred_fallthru
        _
    $region28: #{cbam3d_forward.4} parent=5 // pred_fallthru
      _
    %p623 = scmp.le.s32.totalorder 2, %s8
    // Predicated region
    $region33: #{cbam3d_forward.4} parent=5 // pred_check
      %p624 = pneg %p623
    $region34: #{cbam3d_forward.4} parent=5 // pred_check_branch
      %626 = sbr.rel (%p624) target = $region36
    $region35: #{cbam3d_forward.4} parent=5 // pred_region
      %s627 = ssub.s32 %s8, 2
      // Predicated region
      $region37: #{cbam3d_forward.4} parent=35 // pred_check
        %p628 = pneg %p105
      $region38: #{cbam3d_forward.4} parent=35 // pred_check_branch
        %630 = sbr.rel (%p628) target = $region40
      $region39: #{cbam3d_forward.4} parent=35 // pred_region
        %p631 = scmp.lt.s32.totalorder %s19, 1
        %s632 = scalar_select %p631, %s19, 1
        %p633 = scmp.lt.s32.totalorder %s20, 0
        %s634 = scalar_select %p633, %s20, 0
        %s635 = sadd.s32 %s634, %s632
        %s636 = smul.addr %s635, 8
        %s637 = scalar_lea.vmem %s2, %s636
      $region40: #{cbam3d_forward.4} parent=35 // pred_fallthru
        _
    $region36: #{cbam3d_forward.4} parent=5 // pred_fallthru
      _
  $region6: #{cbam3d_forward.4} parent=0 // loop_footer
    %s12 = sadd.s32 1, %s8
  $region7: #{cbam3d_forward.4} parent=0 // loop_footer_branch
    %7 = sbr.rel target = $region3
  $region8: #{cbam3d_forward.4} parent=0 // loop_exit
    _

// kernel: cbam3d_forward.5
$region0: #{cbam3d_forward.5}
  #allocation0 [shape = 'u32[]', space=smem, size = 0x4, offset = 0x4, fixed_abs, tag = 'smem constant byte address 0x4 - core index']
  #allocation1 [shape = 'u32[144,128]{1,0:T(1,128)}', space=vmem, size = 0x12000, scoped, tag = 'internal scratch']
  %s0 = inlined_call_operand.vmem [shape: f32[2,12,128], index: 0, kind: input, shape index: {}]
  %s1 = inlined_call_operand.vmem [shape: f32[5,128,64], index: 1, kind: input, shape index: {}]
  %s2 = inlined_call_operand.vmem [shape: f32[2,32,8,64], index: 2, kind: input, shape index: {}]
  %s3 = inlined_call_operand.vmem [shape: f32[2,32,1,64], index: 3, kind: input, shape index: {}]
  %s4 = inlined_call_operand.vmem [shape: f32[2,32,8,64], index: 4, kind: output, shape index: {}]
  %s5 = sld [smem:[#allocation0]]
  $region49: #{cbam3d_forward.5} parent=0
    _
  %s7 = ssub.s32 1, %s5
  %s8 = scalar_select 0, %s7, %s5
  loop: start=0, step=1, limit=4
  $region2: #{cbam3d_forward.5} parent=0 // loop_pre_header
    _
  $region3: #{cbam3d_forward.5} parent=0 // loop_header
    %s10 = sphi 0, %s14
    %p11 = scmp.ge.s32.totalorder %s10, 4
    %s17 = sphi 0, %s29
    %s18 = sphi 0, %s25
    %s19 = sphi 0, %s17
    %s20 = sphi 0, %s18
    %s21 = sphi 0, %s19
    %s22 = sphi 0, %s20
    %s32 = sphi 0, %s34
    %s35 = sphi 0, %s32
    %s36 = sphi 0, %s35
    %s52 = sphi 0, %s36
    %s56 = sphi 0, %s56
    %s58 = sphi 0, %s56
    %s59 = sphi 0, %s58
    %s73 = sphi 0, %s59
    %s81 = sphi 0, %s83
    %s84 = sphi 0, %s81
    %s85 = sphi 0, %s84
    %s101 = sphi 0, %s85
    %s107 = sphi 0, %s109
    %s110 = sphi 0, %s107
    %s111 = sphi 0, %s110
    %s127 = sphi 0, %s111
    %s135 = sphi 0, %s137
    %s138 = sphi 0, %s135
    %s139 = sphi 0, %s138
    %s155 = sphi 0, %s139
  $region4: #{cbam3d_forward.5} parent=0 // loop_header_branch
    %13 = sbr.rel (%p11) target = $region8
  $region5: #{cbam3d_forward.5} parent=0 // loop_body
    %s15 = ssub.s32 %s10, 1
    %s16 = ssub.s32 %s10, 2
    %s23 = sadd.s32 1, %s18
    %p24 = scmp.ge.s32.totalorder %s23, 1
    %s25 = scalar_select %p24, 0, %s23
    %s26 = sadd.s32 1, %s17
    %s27 = scalar_select %p24, %s26, %s17
    %p28 = scmp.ge.s32.totalorder %s27, 2
    %s29 = scalar_select %p28, 0, %s27
    %s30 = ssub.s32 %s17, %s29
    %p31 = scmp.eq.s32.totalorder %s30, 0
    %s33 = sadd.s32 %s32, 1
    %s34 = scalar_select %p31, %s32, %s33
    %p37 = pneg %p31
    %p38 = scmp.eq.s32.totalorder %s10, 1
    %p39 = por %p37, %p38
    %p40 = scmp.ne.s32.totalorder %s32, %s35
    %p41 = scmp.eq.s32.totalorder %s10, 0
    %p42 = por %p40, %p41
    %p43 = scmp.ne.s32.totalorder %s32, %s35
    %p44 = scmp.eq.s32.totalorder %s15, 1
    %p45 = por %p43, %p44
    %p46 = scmp.ne.s32.totalorder %s35, %s36
    %p47 = scmp.eq.s32.totalorder %s15, 0
    %p48 = por %p46, %p47
    %p49 = scmp.ne.s32.totalorder %s35, %s36
    %p50 = scmp.eq.s32.totalorder %s16, 1
    %p51 = por %p49, %p50
    %p53 = scmp.ne.s32.totalorder %s36, %s52
    %p54 = scmp.eq.s32.totalorder %s16, 0
    %p55 = por %p53, %p54
    %s57 = sadd.s32 %s56, 1
    %p60 = scmp.eq.s32.totalorder %s10, 1
    %p61 = scmp.ne.s32.totalorder %s56, %s58
    %p62 = scmp.eq.s32.totalorder %s10, 0
    %p63 = por %p61, %p62
    %p64 = scmp.ne.s32.totalorder %s56, %s58
    %p65 = scmp.eq.s32.totalorder %s15, 1
    %p66 = por %p64, %p65
    %p67 = scmp.ne.s32.totalorder %s58, %s59
    %p68 = scmp.eq.s32.totalorder %s15, 0
    %p69 = por %p67, %p68
    %p70 = scmp.ne.s32.totalorder %s58, %s59
    %p71 = scmp.eq.s32.totalorder %s16, 1
    %p72 = por %p70, %p71
    %p74 = scmp.ne.s32.totalorder %s59, %s73
    %p75 = scmp.eq.s32.totalorder %s16, 0
    %p76 = por %p74, %p75
    %s77 = ssub.s32 %s17, %s29
    %s78 = ssub.s32 %s18, %s25
    %s79 = sor.u32 %s77, %s78
    %p80 = scmp.eq.s32.totalorder %s79, 0
    %s82 = sadd.s32 %s81, 1
    %s83 = scalar_select %p80, %s81, %s82
    %p86 = pneg %p80
    %p87 = scmp.eq.s32.totalorder %s10, 1
    %p88 = por %p86, %p87
    %p89 = scmp.ne.s32.totalorder %s81, %s84
    %p90 = scmp.eq.s32.totalorder %s10, 0
    %p91 = por %p89, %p90
    %p92 = scmp.ne.s32.totalorder %s81, %s84
    %p93 = scmp.eq.s32.totalorder %s15, 1
    %p94 = por %p92, %p93
    %p95 = scmp.ne.s32.totalorder %s84, %s85
    %p96 = scmp.eq.s32.totalorder %s15, 0
    %p97 = por %p95, %p96
    %p98 = scmp.ne.s32.totalorder %s84, %s85
    %p99 = scmp.eq.s32.totalorder %s16, 1
    %p100 = por %p98, %p99
    %p102 = scmp.ne.s32.totalorder %s85, %s101
    %p103 = scmp.eq.s32.totalorder %s16, 0
    %p104 = por %p102, %p103
    %s105 = ssub.s32 %s17, %s29
    %p106 = scmp.eq.s32.totalorder %s105, 0
    %s108 = sadd.s32 %s107, 1
    %s109 = scalar_select %p106, %s107, %s108
    %p112 = pneg %p106
    %p113 = scmp.eq.s32.totalorder %s10, 1
    %p114 = por %p112, %p113
    %p115 = scmp.ne.s32.totalorder %s107, %s110
    %p116 = scmp.eq.s32.totalorder %s10, 0
    %p117 = por %p115, %p116
    %p118 = scmp.ne.s32.totalorder %s107, %s110
    %p119 = scmp.eq.s32.totalorder %s15, 1
    %p120 = por %p118, %p119
    %p121 = scmp.ne.s32.totalorder %s110, %s111
    %p122 = scmp.eq.s32.totalorder %s15, 0
    %p123 = por %p121, %p122
    %p124 = scmp.ne.s32.totalorder %s110, %s111
    %p125 = scmp.eq.s32.totalorder %s16, 1
    %p126 = por %p124, %p125
    %p128 = scmp.ne.s32.totalorder %s111, %s127
    %p129 = scmp.eq.s32.totalorder %s16, 0
    %p130 = por %p128, %p129
    %s131 = ssub.s32 %s17, %s29
    %s132 = ssub.s32 %s18, %s25
    %s133 = sor.u32 %s131, %s132
    %p134 = scmp.eq.s32.totalorder %s133, 0
    %s136 = sadd.s32 %s135, 1
    %s137 = scalar_select %p134, %s135, %s136
    %p140 = pneg %p134
    %p141 = scmp.eq.s32.totalorder %s10, 1
    %p142 = por %p140, %p141
    %p143 = scmp.ne.s32.totalorder %s135, %s138
    %p144 = scmp.eq.s32.totalorder %s10, 0
    %p145 = por %p143, %p144
    %p146 = scmp.ne.s32.totalorder %s135, %s138
    %p147 = scmp.eq.s32.totalorder %s15, 1
    %p148 = por %p146, %p147
    %p149 = scmp.ne.s32.totalorder %s138, %s139
    %p150 = scmp.eq.s32.totalorder %s15, 0
    %p151 = por %p149, %p150
    %p152 = scmp.ne.s32.totalorder %s138, %s139
    %p153 = scmp.eq.s32.totalorder %s16, 1
    %p154 = por %p152, %p153
    %p156 = scmp.ne.s32.totalorder %s139, %s155
    %p157 = scmp.eq.s32.totalorder %s16, 0
    %p158 = por %p156, %p157
    %p159 = scmp.le.s32.totalorder 1, %s10
    %p160 = scmp.lt.s32.totalorder %s10, 3
    %p161 = pnand %p159, %p160
    %p162 = pneg %p161
    // Predicated region
    $region9: #{cbam3d_forward.5} parent=5 // pred_check
      _
    $region10: #{cbam3d_forward.5} parent=5 // pred_check_branch
      %164 = sbr.rel (%p161) target = $region12
    $region11: #{cbam3d_forward.5} parent=5 // pred_region
      %s165 = ssub.s32 %s10, 1
      // Predicated region
      $region13: #{cbam3d_forward.5} parent=11 // pred_check
        %p166 = pneg %p69
      $region14: #{cbam3d_forward.5} parent=11 // pred_check_branch
        %168 = sbr.rel (%p166) target = $region16
      $region15: #{cbam3d_forward.5} parent=11 // pred_region
        _
      $region16: #{cbam3d_forward.5} parent=11 // pred_fallthru
        _
    $region12: #{cbam3d_forward.5} parent=5 // pred_fallthru
      _
    %p169 = scmp.lt.s32.totalorder %s10, 2
    // Predicated region
    $region17: #{cbam3d_forward.5} parent=5 // pred_check
      %p170 = pneg %p169
    $region18: #{cbam3d_forward.5} parent=5 // pred_check_branch
      %172 = sbr.rel (%p170) target = $region20
    $region19: #{cbam3d_forward.5} parent=5 // pred_region
      // Predicated region
      $region21: #{cbam3d_forward.5} parent=19 // pred_check
        %p173 = pneg %p42
      $region22: #{cbam3d_forward.5} parent=19 // pred_check_branch
        %175 = sbr.rel (%p173) target = $region24
      $region23: #{cbam3d_forward.5} parent=19 // pred_region
        %p176 = scmp.lt.s32.totalorder %s17, 1
        %s177 = scalar_select %p176, %s17, 1
        %s178 = smul.addr %s177, 2
        %s179 = smul.addr %s178, 8
        %s180 = scalar_lea.vmem %s0, %s179
      $region24: #{cbam3d_forward.5} parent=19 // pred_fallthru
        _
      // Predicated region
      $region25: #{cbam3d_forward.5} parent=19 // pred_check
        %p181 = pneg %p91
      $region26: #{cbam3d_forward.5} parent=19 // pred_check_branch
        %183 = sbr.rel (%p181) target = $region28
      $region27: #{cbam3d_forward.5} parent=19 // pred_region
        %p184 = scmp.lt.s32.totalorder %s17, 1
        %s185 = scalar_select %p184, %s17, 1
        %p186 = scmp.lt.s32.totalorder %s18, 0
        %s187 = scalar_select %p186, %s18, 0
        %s188 = smul.addr %s185, 32
        %s189 = sadd.s32 %s187, %s188
        %s190 = smul.addr %s189, 8
        %s191 = scalar_lea.vmem %s2, %s190
      $region28: #{cbam3d_forward.5} parent=19 // pred_fallthru
        _
      // Predicated region
      $region29: #{cbam3d_forward.5} parent=19 // pred_check
        %p192 = pneg %p117
      $region30: #{cbam3d_forward.5} parent=19 // pred_check_branch
        %194 = sbr.rel (%p192) target = $region32
      $region31: #{cbam3d_forward.5} parent=19 // pred_region
        %p195 = scmp.lt.s32.totalorder %s17, 1
        %s196 = scalar_select %p195, %s17, 1
        %s197 = smul.addr %s196, 32
        %s198 = scalar_lea.vmem %s3, %s197
      $region32: #{cbam3d_forward.5} parent=19 // pred_fallthru
        _
    $region20: #{cbam3d_forward.5} parent=5 // pred_fallthru
      _
    %p199 = scmp.le.s32.totalorder 1, %s10
    %p200 = scmp.lt.s32.totalorder %s10, 3
    %p201 = pnand %p199, %p200
    %p202 = pneg %p201
    // Predicated region
    $region33: #{cbam3d_forward.5} parent=5 // pred_check
      _
    $region34: #{cbam3d_forward.5} parent=5 // pred_check_branch
      %204 = sbr.rel (%p201) target = $region36
    $region35: #{cbam3d_forward.5} parent=5 // pred_region
      %s205 = ssub.s32 %s10, 1
      %p206 = scmp.lt.s32.totalorder %s19, 1
      %s207 = scalar_select %p206, %s19, 1
      %s208 = smul.addr %s207, 2
      %s209 = smul.addr %s208, 8
      %s210 = scalar_lea.vmem %s0, %s209
      %p211 = pneg %p48
      %p212 = pneg %p45
      %p213 = pneg %p69
      %p214 = pneg %p66
      %p215 = scmp.lt.s32.totalorder %s19, 1
      %s216 = scalar_select %p215, %s19, 1
      %p217 = scmp.lt.s32.totalorder %s20, 0
      %s218 = scalar_select %p217, %s20, 0
      %s219 = smul.addr %s216, 32
      %s220 = sadd.s32 %s218, %s219
      %s221 = smul.addr %s220, 8
      %s222 = scalar_lea.vmem %s2, %s221
      %p223 = pneg %p97
      %p224 = pneg %p94
      %p225 = scmp.lt.s32.totalorder %s19, 1
      %s226 = scalar_select %p225, %s19, 1
      %s227 = smul.addr %s226, 32
      %s228 = scalar_lea.vmem %s3, %s227
      %p229 = pneg %p123
      %p230 = pneg %p120
      %p231 = pneg %p151
      %p232 = pneg %p148
      %p233 = scmp.lt.s32.totalorder %s19, 1
      %s234 = scalar_select %p233, %s19, 1
      %p235 = scmp.lt.s32.totalorder %s20, 0
      %s236 = scalar_select %p235, %s20, 0
      %s237 = smul.addr %s234, 32
      %s238 = sadd.s32 %s236, %s237
      %s239 = smul.addr %s238, 8
      %s240 = scalar_lea.vmem %s4, %s239
      %p241 = scmp.lt.s32.totalorder %s19, 1
      %s242 = scalar_select %p241, %s19, 1
      %s243 = smul.addr %s242, 2
      %s244 = smul.addr %s243, 8
      %s245 = scalar_lea.vmem %s0, %s244
      %p246 = scmp.lt.s32.totalorder %s19, 1
      %s247 = scalar_select %p246, %s19, 1
      %p248 = scmp.lt.s32.totalorder %s20, 0
      %s249 = scalar_select %p248, %s20, 0
      %s250 = smul.addr %s247, 32
      %s251 = sadd.s32 %s249, %s250
      %s252 = smul.addr %s251, 8
      %s253 = scalar_lea.vmem %s2, %s252
      %p254 = scmp.lt.s32.totalorder %s19, 1
      %s255 = scalar_select %p254, %s19, 1
      %s256 = smul.addr %s255, 32
      %s257 = scalar_lea.vmem %s3, %s256
      %p258 = scmp.lt.s32.totalorder %s19, 1
      %s259 = scalar_select %p258, %s19, 1
      %p260 = scmp.lt.s32.totalorder %s20, 0
      %s261 = scalar_select %p260, %s20, 0
      %s262 = smul.addr %s259, 32
      %s263 = sadd.s32 %s261, %s262
      %s264 = smul.addr %s263, 8
      %s265 = scalar_lea.vmem %s4, %s264
      %s266 = smul.u32 %s20, 8
      %s267 = scalar_lea.vmem %s245, %s266
      %v268 = vld [vmem:[%s267] sm:$0xff]
      %v269 = vld [vmem:[%s267 + $0x8] sm:$0xf]
      %v270 = vld [vmem:[%s1] sm:$0xff]
      %v271 = vld [vmem:[%s1 + $0x8] sm:$0xff]
      %v272 = vld [vmem:[%s1 + $0x10] sm:$0xff]
      %v273 = vld [vmem:[%s1 + $0x18] sm:$0xff]
      %v274 = vld [vmem:[%s1 + $0x20] sm:$0xff]
      %v275 = vld [vmem:[%s1 + $0x28] sm:$0xff]
      %v276 = vld [vmem:[%s1 + $0x30] sm:$0xff]
      %v277 = vld [vmem:[%s1 + $0x38] sm:$0xff]
      %v278 = vld [vmem:[%s1 + $0x40] sm:$0xff]
      %v279 = vld [vmem:[%s1 + $0x48] sm:$0xff]
      %v280 = vld [vmem:[%s1 + $0x50] sm:$0xff]
      %v281 = vld [vmem:[%s1 + $0x58] sm:$0xff]
      %v282 = vld [vmem:[%s1 + $0x60] sm:$0xff]
      %v283 = vld [vmem:[%s1 + $0x68] sm:$0xff]
      %v284 = vld [vmem:[%s1 + $0x70] sm:$0xff]
      %v285 = vld [vmem:[%s1 + $0x78] sm:$0xff]
      %s286 = scalar_lea.vmem %s1, 128
      %v287 = vld [vmem:[%s286] sm:$0xff]
      %v288 = vld [vmem:[%s286 + $0x8] sm:$0xff]
      %v289 = vld [vmem:[%s286 + $0x10] sm:$0xff]
      %v290 = vld [vmem:[%s286 + $0x18] sm:$0xff]
      %v291 = vld [vmem:[%s286 + $0x20] sm:$0xff]
      %v292 = vld [vmem:[%s286 + $0x28] sm:$0xff]
      %v293 = vld [vmem:[%s286 + $0x30] sm:$0xff]
      %v294 = vld [vmem:[%s286 + $0x38] sm:$0xff]
      %v295 = vld [vmem:[%s286 + $0x40] sm:$0xff]
      %v296 = vld [vmem:[%s286 + $0x48] sm:$0xff]
      %v297 = vld [vmem:[%s286 + $0x50] sm:$0xff]
      %v298 = vld [vmem:[%s286 + $0x58] sm:$0xff]
      %v299 = vld [vmem:[%s286 + $0x60] sm:$0xff]
      %v300 = vld [vmem:[%s286 + $0x68] sm:$0xff]
      %v301 = vld [vmem:[%s286 + $0x70] sm:$0xff]
      %v302 = vld [vmem:[%s286 + $0x78] sm:$0xff]
      %vm305 = vcmask 1046528
      %v306 = vrot.slane %v268, 1
      %v307 = vrot.slane %v269, 1
      %v308 = vsel %vm305, %v306, %v307
      %310 = vmatprep.subr.mxu0 0.0
      %311 = vmatpush1.msra.mxu0 %v287
      %312 = vmatprep.subr.mxu0 0.0
      %313 = vmatpush1.msra.mxu0 %v288
      %314 = vmatprep.subr.mxu0 0.0
      %315 = vmatpush1.msra.mxu0 %v289
      %316 = vmatprep.subr.mxu0 0.0
      %317 = vmatpush1.msra.mxu0 %v290
      %318 = vmatprep.subr.mxu0 0.0
      %319 = vmatpush1.msra.mxu0 %v291
      %320 = vmatprep.subr.mxu0 0.0
      %321 = vmatpush1.msra.mxu0 %v292
      %322 = vmatprep.subr.mxu0 0.0
      %323 = vmatpush1.msra.mxu0 %v293
      %324 = vmatprep.subr.mxu0 0.0
      %325 = vmatpush1.msra.mxu0 %v294
      %326 = vmatprep.subr.mxu0 0.0
      %327 = vmatpush1.msra.mxu0 %v295
      %328 = vmatprep.subr.mxu0 0.0
      %329 = vmatpush1.msra.mxu0 %v296
      %330 = vmatprep.subr.mxu0 0.0
      %331 = vmatpush1.msra.mxu0 %v297
      %332 = vmatprep.subr.mxu0 0.0
      %333 = vmatpush1.msra.mxu0 %v298
      %334 = vmatprep.subr.mxu0 0.0
      %335 = vmatpush1.msra.mxu0 %v299
      %336 = vmatprep.subr.mxu0 0.0
      %337 = vmatpush1.msra.mxu0 %v300
      %338 = vmatprep.subr.mxu0 0.0
      %339 = vmatpush1.msra.mxu0 %v301
      %340 = vmatprep.subr.mxu0 0.0
      %341 = vmatpush1.msra.mxu0 %v302
      %342 = vmatprep.subr.mxu0 0.0
      %343 = vmatpush1.msra.mxu0 0.0
      %344 = vmatprep.subr.mxu0 0.0
      %345 = vmatpush1.msra.mxu0 0.0
      %346 = vmatprep.subr.mxu0 0.0
      %347 = vmatpush1.msra.mxu0 0.0
      %348 = vmatprep.subr.mxu0 0.0
      %349 = vmatpush1.msra.mxu0 0.0
      %350 = vmatprep.subr.mxu0 0.0
      %351 = vmatpush1.msra.mxu0 0.0
      %352 = vmatprep.subr.mxu0 0.0
      %353 = vmatpush1.msra.mxu0 0.0
      %354 = vmatprep.subr.mxu0 0.0
      %355 = vmatpush1.msra.mxu0 0.0
      %356 = vmatprep.subr.mxu0 0.0
      %357 = vmatpush1.msra.mxu0 0.0
      %358 = vmatprep.subr.mxu0 0.0
      %359 = vmatpush1.msra.mxu0 0.0
      %360 = vmatprep.subr.mxu0 0.0
      %361 = vmatpush1.msra.mxu0 0.0
      %362 = vmatprep.subr.mxu0 0.0
      %363 = vmatpush1.msra.mxu0 0.0
      %364 = vmatprep.subr.mxu0 0.0
      %365 = vmatpush1.msra.mxu0 0.0
      %366 = vmatprep.subr.mxu0 0.0
      %367 = vmatpush1.msra.mxu0 0.0
      %368 = vmatprep.subr.mxu0 0.0
      %369 = vmatpush1.msra.mxu0 0.0
      %370 = vmatprep.subr.mxu0 0.0
      %371 = vmatpush1.msra.mxu0 0.0
      %372 = vmatprep.subr.mxu0 0.0
      %373 = vmatpush1.msra.mxu0 0.0
      %374 = vmatprep.mubr.f32.mxu0 0.0
      %375 = vmatmul.mubr.f32.gmra.mrb[0].mxu0 %v308
      %v376 = vpop.f32.mrb[0].mxu0
      %v377 = vadd.f32 0.0, %v376
      %v378 = vpop.f32.mrb[0].mxu0
      %379 = vdwg.mxu0
      %380 = vmatprep.subr.mxu0 0.0
      %381 = vmatpush1.msra.mxu0 %v270
      %382 = vmatprep.subr.mxu0 0.0
      %383 = vmatpush1.msra.mxu0 %v271
      %384 = vmatprep.subr.mxu0 0.0
      %385 = vmatpush1.msra.mxu0 %v272
      %386 = vmatprep.subr.mxu0 0.0
      %387 = vmatpush1.msra.mxu0 %v273
      %388 = vmatprep.subr.mxu0 0.0
      %389 = vmatpush1.msra.mxu0 %v274
      %390 = vmatprep.subr.mxu0 0.0
      %391 = vmatpush1.msra.mxu0 %v275
      %392 = vmatprep.subr.mxu0 0.0
      %393 = vmatpush1.msra.mxu0 %v276
      %394 = vmatprep.subr.mxu0 0.0
      %395 = vmatpush1.msra.mxu0 %v277
      %396 = vmatprep.subr.mxu0 0.0
      %397 = vmatpush1.msra.mxu0 %v278
      %398 = vmatprep.subr.mxu0 0.0
      %399 = vmatpush1.msra.mxu0 %v279
      %400 = vmatprep.subr.mxu0 0.0
      %401 = vmatpush1.msra.mxu0 %v280
      %402 = vmatprep.subr.mxu0 0.0
      %403 = vmatpush1.msra.mxu0 %v281
      %404 = vmatprep.subr.mxu0 0.0
      %405 = vmatpush1.msra.mxu0 %v282
      %406 = vmatprep.subr.mxu0 0.0
      %407 = vmatpush1.msra.mxu0 %v283
      %408 = vmatprep.subr.mxu0 0.0
      %409 = vmatpush1.msra.mxu0 %v284
      %410 = vmatprep.subr.mxu0 0.0
      %411 = vmatpush1.msra.mxu0 %v285
      %412 = vmatprep.subr.mxu0 0.0
      %413 = vmatpush1.msra.mxu0 0.0
      %414 = vmatprep.subr.mxu0 0.0
      %415 = vmatpush1.msra.mxu0 0.0
      %416 = vmatprep.subr.mxu0 0.0
      %417 = vmatpush1.msra.mxu0 0.0
      %418 = vmatprep.subr.mxu0 0.0
      %419 = vmatpush1.msra.mxu0 0.0
      %420 = vmatprep.subr.mxu0 0.0
      %421 = vmatpush1.msra.mxu0 0.0
      %422 = vmatprep.subr.mxu0 0.0
      %423 = vmatpush1.msra.mxu0 0.0
      %424 = vmatprep.subr.mxu0 0.0
      %425 = vmatpush1.msra.mxu0 0.0
      %426 = vmatprep.subr.mxu0 0.0
      %427 = vmatpush1.msra.mxu0 0.0
      %428 = vmatprep.subr.mxu0 0.0
      %429 = vmatpush1.msra.mxu0 0.0
      %430 = vmatprep.subr.mxu0 0.0
      %431 = vmatpush1.msra.mxu0 0.0
      %432 = vmatprep.subr.mxu0 0.0
      %433 = vmatpush1.msra.mxu0 0.0
      %434 = vmatprep.subr.mxu0 0.0
      %435 = vmatpush1.msra.mxu0 0.0
      %436 = vmatprep.subr.mxu0 0.0
      %437 = vmatpush1.msra.mxu0 0.0
      %438 = vmatprep.subr.mxu0 0.0
      %439 = vmatpush1.msra.mxu0 0.0
      %440 = vmatprep.subr.mxu0 0.0
      %441 = vmatpush1.msra.mxu0 0.0
      %442 = vmatprep.subr.mxu0 0.0
      %443 = vmatpush1.msra.mxu0 0.0
      %444 = vmatprep.mubr.f32.mxu0 0.0
      %445 = vmatmul.mubr.f32.gmra.mrb[0].mxu0 %v268
      %v446 = vpop.f32.mrb[0].mxu0
      %v447 = vadd.f32 %v377, %v446
      %v448 = vpop.f32.mrb[0].mxu0
      %449 = vdwg.mxu0
      %s450 = scalar_lea.vmem %s1, 256
      %v451 = vld [vmem:[%s450] sm:$0xff]
      %v452 = vld [vmem:[%s450 + $0x8] sm:$0xff]
      %v453 = vld [vmem:[%s450 + $0x10] sm:$0xff]
      %v454 = vld [vmem:[%s450 + $0x18] sm:$0xff]
      %v455 = vld [vmem:[%s450 + $0x20] sm:$0xff]
      %v456 = vld [vmem:[%s450 + $0x28] sm:$0xff]
      %v457 = vld [vmem:[%s450 + $0x30] sm:$0xff]
      %v458 = vld [vmem:[%s450 + $0x38] sm:$0xff]
      %v459 = vld [vmem:[%s450 + $0x40] sm:$0xff]
      %v460 = vld [vmem:[%s450 + $0x48] sm:$0xff]
      %v461 = vld [vmem:[%s450 + $0x50] sm:$0xff]
      %v462 = vld [vmem:[%s450 + $0x58] sm:$0xff]
      %v463 = vld [vmem:[%s450 + $0x60] sm:$0xff]
      %v464 = vld [vmem:[%s450 + $0x68] sm:$0xff]
      %v465 = vld [vmem:[%s450 + $0x70] sm:$0xff]
      %v466 = vld [vmem:[%s450 + $0x78] sm:$0xff]
      %vm467 = vcmask 1045504
      %v468 = vrot.slane %v268, 2
      %v469 = vrot.slane %v269, 2
      %v470 = vsel %vm467, %v468, %v469
      %472 = vmatprep.subr.mxu0 0.0
      %473 = vmatpush1.msra.mxu0 %v451
      %474 = vmatprep.subr.mxu0 0.0
      %475 = vmatpush1.msra.mxu0 %v452
      %476 = vmatprep.subr.mxu0 0.0
      %477 = vmatpush1.msra.mxu0 %v453
      %478 = vmatprep.subr.mxu0 0.0
      %479 = vmatpush1.msra.mxu0 %v454
      %480 = vmatprep.subr.mxu0 0.0
      %481 = vmatpush1.msra.mxu0 %v455
      %482 = vmatprep.subr.mxu0 0.0
      %483 = vmatpush1.msra.mxu0 %v456
      %484 = vmatprep.subr.mxu0 0.0
      %485 = vmatpush1.msra.mxu0 %v457
      %486 = vmatprep.subr.mxu0 0.0
      %487 = vmatpush1.msra.mxu0 %v458
      %488 = vmatprep.subr.mxu0 0.0
      %489 = vmatpush1.msra.mxu0 %v459
      %490 = vmatprep.subr.mxu0 0.0
      %491 = vmatpush1.msra.mxu0 %v460
      %492 = vmatprep.subr.mxu0 0.0
      %493 = vmatpush1.msra.mxu0 %v461
      %494 = vmatprep.subr.mxu0 0.0
      %495 = vmatpush1.msra.mxu0 %v462
      %496 = vmatprep.subr.mxu0 0.0
      %497 = vmatpush1.msra.mxu0 %v463
      %498 = vmatprep.subr.mxu0 0.0
      %499 = vmatpush1.msra.mxu0 %v464
      %500 = vmatprep.subr.mxu0 0.0
      %501 = vmatpush1.msra.mxu0 %v465
      %502 = vmatprep.subr.mxu0 0.0
      %503 = vmatpush1.msra.mxu0 %v466
      %504 = vmatprep.subr.mxu0 0.0
      %505 = vmatpush1.msra.mxu0 0.0
      %506 = vmatprep.subr.mxu0 0.0
      %507 = vmatpush1.msra.mxu0 0.0
      %508 = vmatprep.subr.mxu0 0.0
      %509 = vmatpush1.msra.mxu0 0.0
      %510 = vmatprep.subr.mxu0 0.0
      %511 = vmatpush1.msra.mxu0 0.0
      %512 = vmatprep.subr.mxu0 0.0
      %513 = vmatpush1.msra.mxu0 0.0
      %514 = vmatprep.subr.mxu0 0.0
      %515 = vmatpush1.msra.mxu0 0.0
      %516 = vmatprep.subr.mxu0 0.0
      %517 = vmatpush1.msra.mxu0 0.0
      %518 = vmatprep.subr.mxu0 0.0
      %519 = vmatpush1.msra.mxu0 0.0
      %520 = vmatprep.subr.mxu0 0.0
      %521 = vmatpush1.msra.mxu0 0.0
      %522 = vmatprep.subr.mxu0 0.0
      %523 = vmatpush1.msra.mxu0 0.0
      %524 = vmatprep.subr.mxu0 0.0
      %525 = vmatpush1.msra.mxu0 0.0
      %526 = vmatprep.subr.mxu0 0.0
      %527 = vmatpush1.msra.mxu0 0.0
      %528 = vmatprep.subr.mxu0 0.0
      %529 = vmatpush1.msra.mxu0 0.0
      %530 = vmatprep.subr.mxu0 0.0
      %531 = vmatpush1.msra.mxu0 0.0
      %532 = vmatprep.subr.mxu0 0.0
      %533 = vmatpush1.msra.mxu0 0.0
      %534 = vmatprep.subr.mxu0 0.0
      %535 = vmatpush1.msra.mxu0 0.0
      %536 = vmatprep.mubr.f32.mxu0 0.0
      %537 = vmatmul.mubr.f32.gmra.mrb[0].mxu0 %v470
      %v538 = vpop.f32.mrb[0].mxu0
      %v539 = vadd.f32 0.0, %v538
      %v540 = vpop.f32.mrb[0].mxu0
      %541 = vdwg.mxu0
      %v542 = vadd.f32 %v447, %v539
      %s543 = scalar_lea.vmem %s1, 384
      %v544 = vld [vmem:[%s543] sm:$0xff]
      %v545 = vld [vmem:[%s543 + $0x8] sm:$0xff]
      %v546 = vld [vmem:[%s543 + $0x10] sm:$0xff]
      %v547 = vld [vmem:[%s543 + $0x18] sm:$0xff]
      %v548 = vld [vmem:[%s543 + $0x20] sm:$0xff]
      %v549 = vld [vmem:[%s543 + $0x28] sm:$0xff]
      %v550 = vld [vmem:[%s543 + $0x30] sm:$0xff]
      %v551 = vld [vmem:[%s543 + $0x38] sm:$0xff]
      %v552 = vld [vmem:[%s543 + $0x40] sm:$0xff]
      %v553 = vld [vmem:[%s543 + $0x48] sm:$0xff]
      %v554 = vld [vmem:[%s543 + $0x50] sm:$0xff]
      %v555 = vld [vmem:[%s543 + $0x58] sm:$0xff]
      %v556 = vld [vmem:[%s543 + $0x60] sm:$0xff]
      %v557 = vld [vmem:[%s543 + $0x68] sm:$0xff]
      %v558 = vld [vmem:[%s543 + $0x70] sm:$0xff]
      %v559 = vld [vmem:[%s543 + $0x78] sm:$0xff]
      %vm560 = vcmask 1044480
      %v561 = vrot.slane %v268, 3
      %v562 = vrot.slane %v269, 3
      %v563 = vsel %vm560, %v561, %v562
      %565 = vmatprep.subr.mxu0 0.0
      %566 = vmatpush1.msra.mxu0 %v544
      %567 = vmatprep.subr.mxu0 0.0
      %568 = vmatpush1.msra.mxu0 %v545
      %569 = vmatprep.subr.mxu0 0.0
      %570 = vmatpush1.msra.mxu0 %v546
      %571 = vmatprep.subr.mxu0 0.0
      %572 = vmatpush1.msra.mxu0 %v547
      %573 = vmatprep.subr.mxu0 0.0
      %574 = vmatpush1.msra.mxu0 %v548
      %575 = vmatprep.subr.mxu0 0.0
      %576 = vmatpush1.msra.mxu0 %v549
      %577 = vmatprep.subr.mxu0 0.0
      %578 = vmatpush1.msra.mxu0 %v550
      %579 = vmatprep.subr.mxu0 0.0
      %580 = vmatpush1.msra.mxu0 %v551
      %581 = vmatprep.subr.mxu0 0.0
      %582 = vmatpush1.msra.mxu0 %v552
      %583 = vmatprep.subr.mxu0 0.0
      %584 = vmatpush1.msra.mxu0 %v553
      %585 = vmatprep.subr.mxu0 0.0
      %586 = vmatpush1.msra.mxu0 %v554
      %587 = vmatprep.subr.mxu0 0.0
      %588 = vmatpush1.msra.mxu0 %v555
      %589 = vmatprep.subr.mxu0 0.0
      %590 = vmatpush1.msra.mxu0 %v556
      %591 = vmatprep.subr.mxu0 0.0
      %592 = vmatpush1.msra.mxu0 %v557
      %593 = vmatprep.subr.mxu0 0.0
      %594 = vmatpush1.msra.mxu0 %v558
      %595 = vmatprep.subr.mxu0 0.0
      %596 = vmatpush1.msra.mxu0 %v559
      %597 = vmatprep.subr.mxu0 0.0
      %598 = vmatpush1.msra.mxu0 0.0
      %599 = vmatprep.subr.mxu0 0.0
      %600 = vmatpush1.msra.mxu0 0.0
      %601 = vmatprep.subr.mxu0 0.0
      %602 = vmatpush1.msra.mxu0 0.0
      %603 = vmatprep.subr.mxu0 0.0
      %604 = vmatpush1.msra.mxu0 0.0
      %605 = vmatprep.subr.mxu0 0.0
      %606 = vmatpush1.msra.mxu0 0.0
      %607 = vmatprep.subr.mxu0 0.0
      %608 = vmatpush1.msra.mxu0 0.0
      %609 = vmatprep.subr.mxu0 0.0
      %610 = vmatpush1.msra.mxu0 0.0
      %611 = vmatprep.subr.mxu0 0.0
      %612 = vmatpush1.msra.mxu0 0.0
      %613 = vmatprep.subr.mxu0 0.0
      %614 = vmatpush1.msra.mxu0 0.0
      %615 = vmatprep.subr.mxu0 0.0
      %616 = vmatpush1.msra.mxu0 0.0
      %617 = vmatprep.subr.mxu0 0.0
      %618 = vmatpush1.msra.mxu0 0.0
      %619 = vmatprep.subr.mxu0 0.0
      %620 = vmatpush1.msra.mxu0 0.0
      %621 = vmatprep.subr.mxu0 0.0
      %622 = vmatpush1.msra.mxu0 0.0
      %623 = vmatprep.subr.mxu0 0.0
      %624 = vmatpush1.msra.mxu0 0.0
      %625 = vmatprep.subr.mxu0 0.0
      %626 = vmatpush1.msra.mxu0 0.0
      %627 = vmatprep.subr.mxu0 0.0
      %628 = vmatpush1.msra.mxu0 0.0
      %629 = vmatprep.mubr.f32.mxu0 0.0
      %630 = vmatmul.mubr.f32.gmra.mrb[0].mxu0 %v563
      %v631 = vpop.f32.mrb[0].mxu0
      %v632 = vadd.f32 0.0, %v631
      %v633 = vpop.f32.mrb[0].mxu0
      %634 = vdwg.mxu0
      %v635 = vadd.f32 %v542, %v632
      %s636 = scalar_lea.vmem %s1, 512
      %v637 = vld [vmem:[%s636] sm:$0xff]
      %v638 = vld [vmem:[%s636 + $0x8] sm:$0xff]
      %v639 = vld [vmem:[%s636 + $0x10] sm:$0xff]
      %v640 = vld [vmem:[%s636 + $0x18] sm:$0xff]
      %v641 = vld [vmem:[%s636 + $0x20] sm:$0xff]
      %v642 = vld [vmem:[%s636 + $0x28] sm:$0xff]
      %v643 = vld [vmem:[%s636 + $0x30] sm:$0xff]
      %v644 = vld [vmem:[%s636 + $0x38] sm:$0xff]
      %v645 = vld [vmem:[%s636 + $0x40] sm:$0xff]
      %v646 = vld [vmem:[%s636 + $0x48] sm:$0xff]
      %v647 = vld [vmem:[%s636 + $0x50] sm:$0xff]
      %v648 = vld [vmem:[%s636 + $0x58] sm:$0xff]
      %v649 = vld [vmem:[%s636 + $0x60] sm:$0xff]
      %v650 = vld [vmem:[%s636 + $0x68] sm:$0xff]
      %v651 = vld [vmem:[%s636 + $0x70] sm:$0xff]
      %v652 = vld [vmem:[%s636 + $0x78] sm:$0xff]
      %vm653 = vcmask 1043456
      %v654 = vrot.slane %v268, 4
      %v655 = vrot.slane %v269, 4
      %v656 = vsel %vm653, %v654, %v655
      %658 = vmatprep.subr.mxu0 0.0
      %659 = vmatpush1.msra.mxu0 %v637
      %660 = vmatprep.subr.mxu0 0.0
      %661 = vmatpush1.msra.mxu0 %v638
      %662 = vmatprep.subr.mxu0 0.0
      %663 = vmatpush1.msra.mxu0 %v639
      %664 = vmatprep.subr.mxu0 0.0
      %665 = vmatpush1.msra.mxu0 %v640
      %666 = vmatprep.subr.mxu0 0.0
      %667 = vmatpush1.msra.mxu0 %v641
      %668 = vmatprep.subr.mxu0 0.0
      %669 = vmatpush1.msra.mxu0 %v642
      %670 = vmatprep.subr.mxu0 0.0
      %671 = vmatpush1.msra.mxu0 %v643
      %672 = vmatprep.subr.mxu0 0.0
      %673 = vmatpush1.msra.mxu0 %v644
      %674 = vmatprep.subr.mxu0 0.0
      %675 = vmatpush1.msra.mxu0 %v645
      %676 = vmatprep.subr.mxu0 0.0
      %677 = vmatpush1.msra.mxu0 %v646
      %678 = vmatprep.subr.mxu0 0.0
      %679 = vmatpush1.msra.mxu0 %v647
      %680 = vmatprep.subr.mxu0 0.0
      %681 = vmatpush1.msra.mxu0 %v648
      %682 = vmatprep.subr.mxu0 0.0
      %683 = vmatpush1.msra.mxu0 %v649
      %684 = vmatprep.subr.mxu0 0.0
      %685 = vmatpush1.msra.mxu0 %v650
      %686 = vmatprep.subr.mxu0 0.0
      %687 = vmatpush1.msra.mxu0 %v651
      %688 = vmatprep.subr.mxu0 0.0
      %689 = vmatpush1.msra.mxu0 %v652
      %690 = vmatprep.subr.mxu0 0.0
      %691 = vmatpush1.msra.mxu0 0.0
      %692 = vmatprep.subr.mxu0 0.0
      %693 = vmatpush1.msra.mxu0 0.0
      %694 = vmatprep.subr.mxu0 0.0
      %695 = vmatpush1.msra.mxu0 0.0
      %696 = vmatprep.subr.mxu0 0.0
      %697 = vmatpush1.msra.mxu0 0.0
      %698 = vmatprep.subr.mxu0 0.0
      %699 = vmatpush1.msra.mxu0 0.0
      %700 = vmatprep.subr.mxu0 0.0
      %701 = vmatpush1.msra.mxu0 0.0
      %702 = vmatprep.subr.mxu0 0.0
      %703 = vmatpush1.msra.mxu0 0.0
      %704 = vmatprep.subr.mxu0 0.0
      %705 = vmatpush1.msra.mxu0 0.0
      %706 = vmatprep.subr.mxu0 0.0
      %707 = vmatpush1.msra.mxu0 0.0
      %708 = vmatprep.subr.mxu0 0.0
      %709 = vmatpush1.msra.mxu0 0.0
      %710 = vmatprep.subr.mxu0 0.0
      %711 = vmatpush1.msra.mxu0 0.0
      %712 = vmatprep.subr.mxu0 0.0
      %713 = vmatpush1.msra.mxu0 0.0
      %714 = vmatprep.subr.mxu0 0.0
      %715 = vmatpush1.msra.mxu0 0.0
      %716 = vmatprep.subr.mxu0 0.0
      %717 = vmatpush1.msra.mxu0 0.0
      %718 = vmatprep.subr.mxu0 0.0
      %719 = vmatpush1.msra.mxu0 0.0
      %720 = vmatprep.subr.mxu0 0.0
      %721 = vmatpush1.msra.mxu0 0.0
      %722 = vmatprep.mubr.f32.mxu0 0.0
      %723 = vmatmul.mubr.f32.gmra.mrb[0].mxu0 %v656
      %v724 = vpop.f32.mrb[0].mxu0
      %v725 = vadd.f32 0.0, %v724
      %v726 = vpop.f32.mrb[0].mxu0
      %727 = vdwg.mxu0
      %v728 = vadd.f32 %v635, %v725
      %v729 = vxor.u32 %v728, 2147483648
      %v730 = vmul.f32 %v729, 1.442695
      %v731 = vpow.pop %v730
      %v732 = vadd.f32 %v731, 1.0
      %v733 = vrcp.pop %v732
      %v734 = vmul.f32 1.0, %v733
      %v735 = vld [vmem:[%s253] sm:$0xff]
      %v736 = vld [vmem:[%s253 + $0x8] sm:$0xff]
      %v737 = vld [vmem:[%s253 + $0x10] sm:$0xff]
      %v738 = vld [vmem:[%s253 + $0x18] sm:$0xff]
      %v739 = vld [vmem:[%s253 + $0x20] sm:$0xff]
      %v740 = vld [vmem:[%s253 + $0x28] sm:$0xff]
      %v741 = vld [vmem:[%s253 + $0x30] sm:$0xff]
      %v742 = vld [vmem:[%s253 + $0x38] sm:$0xff]
      %v743 = vld [vmem:[%s253 + $0x40] sm:$0xff]
      %v744 = vld [vmem:[%s253 + $0x48] sm:$0xff]
      %v745 = vld [vmem:[%s253 + $0x50] sm:$0xff]
      %v746 = vld [vmem:[%s253 + $0x58] sm:$0xff]
      %v747 = vld [vmem:[%s253 + $0x60] sm:$0xff]
      %v748 = vld [vmem:[%s253 + $0x68] sm:$0xff]
      %v749 = vld [vmem:[%s253 + $0x70] sm:$0xff]
      %v750 = vld [vmem:[%s253 + $0x78] sm:$0xff]
      %v751 = vld [vmem:[%s253 + $0x80] sm:$0xff]
      %v752 = vld [vmem:[%s253 + $0x88] sm:$0xff]
      %v753 = vld [vmem:[%s253 + $0x90] sm:$0xff]
      %v754 = vld [vmem:[%s253 + $0x98] sm:$0xff]
      %v755 = vld [vmem:[%s253 + $0xa0] sm:$0xff]
      %v756 = vld [vmem:[%s253 + $0xa8] sm:$0xff]
      %v757 = vld [vmem:[%s253 + $0xb0] sm:$0xff]
      %v758 = vld [vmem:[%s253 + $0xb8] sm:$0xff]
      %v759 = vld [vmem:[%s253 + $0xc0] sm:$0xff]
      %v760 = vld [vmem:[%s253 + $0xc8] sm:$0xff]
      %v761 = vld [vmem:[%s253 + $0xd0] sm:$0xff]
      %v762 = vld [vmem:[%s253 + $0xd8] sm:$0xff]
      %v763 = vld [vmem:[%s253 + $0xe0] sm:$0xff]
      %v764 = vld [vmem:[%s253 + $0xe8] sm:$0xff]
      %v765 = vld [vmem:[%s253 + $0xf0] sm:$0xff]
      %v766 = vld [vmem:[%s253 + $0xf8] sm:$0xff]
      %v767 = vld [vmem:[%s257] sm:$0x1]
      %v768 = vld [vmem:[%s257 + $0x1] sm:$0x1]
      %v769 = vld [vmem:[%s257 + $0x2] sm:$0x1]
      %v770 = vld [vmem:[%s257 + $0x3] sm:$0x1]
      %v771 = vld [vmem:[%s257 + $0x4] sm:$0x1]
      %v772 = vld [vmem:[%s257 + $0x5] sm:$0x1]
      %v773 = vld [vmem:[%s257 + $0x6] sm:$0x1]
      %v774 = vld [vmem:[%s257 + $0x7] sm:$0x1]
      %v775 = vld [vmem:[%s257 + $0x8] sm:$0x1]
      %v776 = vld [vmem:[%s257 + $0x9] sm:$0x1]
      %v777 = vld [vmem:[%s257 + $0xa] sm:$0x1]
      %v778 = vld [vmem:[%s257 + $0xb] sm:$0x1]
      %v779 = vld [vmem:[%s257 + $0xc] sm:$0x1]
      %v780 = vld [vmem:[%s257 + $0xd] sm:$0x1]
      %v781 = vld [vmem:[%s257 + $0xe] sm:$0x1]
      %v782 = vld [vmem:[%s257 + $0xf] sm:$0x1]
      %v783 = vld [vmem:[%s257 + $0x10] sm:$0x1]
      %v784 = vld [vmem:[%s257 + $0x11] sm:$0x1]
      %v785 = vld [vmem:[%s257 + $0x12] sm:$0x1]
      %v786 = vld [vmem:[%s257 + $0x13] sm:$0x1]
      %v787 = vld [vmem:[%s257 + $0x14] sm:$0x1]
      %v788 = vld [vmem:[%s257 + $0x15] sm:$0x1]
      %v789 = vld [vmem:[%s257 + $0x16] sm:$0x1]
      %v790 = vld [vmem:[%s257 + $0x17] sm:$0x1]
      %v791 = vld [vmem:[%s257 + $0x18] sm:$0x1]
      %v792 = vld [vmem:[%s257 + $0x19] sm:$0x1]
      %v793 = vld [vmem:[%s257 + $0x1a] sm:$0x1]
      %v794 = vld [vmem:[%s257 + $0x1b] sm:$0x1]
      %v795 = vld [vmem:[%s257 + $0x1c] sm:$0x1]
      %v796 = vld [vmem:[%s257 + $0x1d] sm:$0x1]
      %v797 = vld [vmem:[%s257 + $0x1e] sm:$0x1]
      %v798 = vld [vmem:[%s257 + $0x1f] sm:$0x1]
      %v831 = vlaneseq
      %v832 = vshrl.u32 %v831, 7
      %v833 = vsub.s32 0, %v832
      %v834 = vrot.slane %v767, %v833
      %v835 = vlaneseq
      %v836 = vshrl.u32 %v835, 7
      %v837 = vsub.s32 0, %v836
      %v838 = vrot.slane %v768, %v837
      %v839 = vlaneseq
      %v840 = vshrl.u32 %v839, 7
      %v841 = vsub.s32 0, %v840
      %v842 = vrot.slane %v769, %v841
      %v843 = vlaneseq
      %v844 = vshrl.u32 %v843, 7
      %v845 = vsub.s32 0, %v844
      %v846 = vrot.slane %v770, %v845
      %v847 = vlaneseq
      %v848 = vshrl.u32 %v847, 7
      %v849 = vsub.s32 0, %v848
      %v850 = vrot.slane %v771, %v849
      %v851 = vlaneseq
      %v852 = vshrl.u32 %v851, 7
      %v853 = vsub.s32 0, %v852
      %v854 = vrot.slane %v772, %v853
      %v855 = vlaneseq
      %v856 = vshrl.u32 %v855, 7
      %v857 = vsub.s32 0, %v856
      %v858 = vrot.slane %v773, %v857
      %v859 = vlaneseq
      %v860 = vshrl.u32 %v859, 7
      %v861 = vsub.s32 0, %v860
      %v862 = vrot.slane %v774, %v861
      %v863 = vlaneseq
      %v864 = vshrl.u32 %v863, 7
      %v865 = vsub.s32 0, %v864
      %v866 = vrot.slane %v775, %v865
      %v867 = vlaneseq
      %v868 = vshrl.u32 %v867, 7
      %v869 = vsub.s32 0, %v868
      %v870 = vrot.slane %v776, %v869
      %v871 = vlaneseq
      %v872 = vshrl.u32 %v871, 7
      %v873 = vsub.s32 0, %v872
      %v874 = vrot.slane %v777, %v873
      %v875 = vlaneseq
      %v876 = vshrl.u32 %v875, 7
      %v877 = vsub.s32 0, %v876
      %v878 = vrot.slane %v778, %v877
      %v879 = vlaneseq
      %v880 = vshrl.u32 %v879, 7
      %v881 = vsub.s32 0, %v880
      %v882 = vrot.slane %v779, %v881
      %v883 = vlaneseq
      %v884 = vshrl.u32 %v883, 7
      %v885 = vsub.s32 0, %v884
      %v886 = vrot.slane %v780, %v885
      %v887 = vlaneseq
      %v888 = vshrl.u32 %v887, 7
      %v889 = vsub.s32 0, %v888
      %v890 = vrot.slane %v781, %v889
      %v891 = vlaneseq
      %v892 = vshrl.u32 %v891, 7
      %v893 = vsub.s32 0, %v892
      %v894 = vrot.slane %v782, %v893
      %v895 = vlaneseq
      %v896 = vshrl.u32 %v895, 7
      %v897 = vsub.s32 0, %v896
      %v898 = vrot.slane %v783, %v897
      %v899 = vlaneseq
      %v900 = vshrl.u32 %v899, 7
      %v901 = vsub.s32 0, %v900
      %v902 = vrot.slane %v784, %v901
      %v903 = vlaneseq
      %v904 = vshrl.u32 %v903, 7
      %v905 = vsub.s32 0, %v904
      %v906 = vrot.slane %v785, %v905
      %v907 = vlaneseq
      %v908 = vshrl.u32 %v907, 7
      %v909 = vsub.s32 0, %v908
      %v910 = vrot.slane %v786, %v909
      %v911 = vlaneseq
      %v912 = vshrl.u32 %v911, 7
      %v913 = vsub.s32 0, %v912
      %v914 = vrot.slane %v787, %v913
      %v915 = vlaneseq
      %v916 = vshrl.u32 %v915, 7
      %v917 = vsub.s32 0, %v916
      %v918 = vrot.slane %v788, %v917
      %v919 = vlaneseq
      %v920 = vshrl.u32 %v919, 7
      %v921 = vsub.s32 0, %v920
      %v922 = vrot.slane %v789, %v921
      %v923 = vlaneseq
      %v924 = vshrl.u32 %v923, 7
      %v925 = vsub.s32 0, %v924
      %v926 = vrot.slane %v790, %v925
      %v927 = vlaneseq
      %v928 = vshrl.u32 %v927, 7
      %v929 = vsub.s32 0, %v928
      %v930 = vrot.slane %v791, %v929
      %v931 = vlaneseq
      %v932 = vshrl.u32 %v931, 7
      %v933 = vsub.s32 0, %v932
      %v934 = vrot.slane %v792, %v933
      %v935 = vlaneseq
      %v936 = vshrl.u32 %v935, 7
      %v937 = vsub.s32 0, %v936
      %v938 = vrot.slane %v793, %v937
      %v939 = vlaneseq
      %v940 = vshrl.u32 %v939, 7
      %v941 = vsub.s32 0, %v940
      %v942 = vrot.slane %v794, %v941
      %v943 = vlaneseq
      %v944 = vshrl.u32 %v943, 7
      %v945 = vsub.s32 0, %v944
      %v946 = vrot.slane %v795, %v945
      %v947 = vlaneseq
      %v948 = vshrl.u32 %v947, 7
      %v949 = vsub.s32 0, %v948
      %v950 = vrot.slane %v796, %v949
      %v951 = vlaneseq
      %v952 = vshrl.u32 %v951, 7
      %v953 = vsub.s32 0, %v952
      %v954 = vrot.slane %v797, %v953
      %v955 = vlaneseq
      %v956 = vshrl.u32 %v955, 7
      %v957 = vsub.s32 0, %v956
      %v958 = vrot.slane %v798, %v957
      %v991 = vmul.f32 %v735, %v834
      %v992 = vmul.f32 %v736, %v838
      %v993 = vmul.f32 %v737, %v842
      %v994 = vmul.f32 %v738, %v846
      %v995 = vmul.f32 %v739, %v850
      %v996 = vmul.f32 %v740, %v854
      %v997 = vmul.f32 %v741, %v858
      %v998 = vmul.f32 %v742, %v862
      %v999 = vmul.f32 %v743, %v866
      %v1000 = vmul.f32 %v744, %v870
      %v1001 = vmul.f32 %v745, %v874
      %v1002 = vmul.f32 %v746, %v878
      %v1003 = vmul.f32 %v747, %v882
      %v1004 = vmul.f32 %v748, %v886
      %v1005 = vmul.f32 %v749, %v890
      %v1006 = vmul.f32 %v750, %v894
      %v1007 = vmul.f32 %v751, %v898
      %v1008 = vmul.f32 %v752, %v902
      %v1009 = vmul.f32 %v753, %v906
      %v1010 = vmul.f32 %v754, %v910
      %v1011 = vmul.f32 %v755, %v914
      %v1012 = vmul.f32 %v756, %v918
      %v1013 = vmul.f32 %v757, %v922
      %v1014 = vmul.f32 %v758, %v926
      %v1015 = vmul.f32 %v759, %v930
      %v1016 = vmul.f32 %v760, %v934
      %v1017 = vmul.f32 %v761, %v938
      %v1018 = vmul.f32 %v762, %v942
      %v1019 = vmul.f32 %v763, %v946
      %v1020 = vmul.f32 %v764, %v950
      %v1021 = vmul.f32 %v765, %v954
      %v1022 = vmul.f32 %v766, %v958
      %v1023 = vmul.f32 %v991, %v734
      %v1024 = vmul.f32 %v992, %v734
      %v1025 = vmul.f32 %v993, %v734
      %v1026 = vmul.f32 %v994, %v734
      %v1027 = vmul.f32 %v995, %v734
      %v1028 = vmul.f32 %v996, %v734
      %v1029 = vmul.f32 %v997, %v734
      %v1030 = vmul.f32 %v998, %v734
      %v1031 = vmul.f32 %v999, %v734
      %v1032 = vmul.f32 %v1000, %v734
      %v1033 = vmul.f32 %v1001, %v734
      %v1034 = vmul.f32 %v1002, %v734
      %v1035 = vmul.f32 %v1003, %v734
      %v1036 = vmul.f32 %v1004, %v734
      %v1037 = vmul.f32 %v1005, %v734
      %v1038 = vmul.f32 %v1006, %v734
      %v1039 = vmul.f32 %v1007, %v734
      %v1040 = vmul.f32 %v1008, %v734
      %v1041 = vmul.f32 %v1009, %v734
      %v1042 = vmul.f32 %v1010, %v734
      %v1043 = vmul.f32 %v1011, %v734
      %v1044 = vmul.f32 %v1012, %v734
      %v1045 = vmul.f32 %v1013, %v734
      %v1046 = vmul.f32 %v1014, %v734
      %v1047 = vmul.f32 %v1015, %v734
      %v1048 = vmul.f32 %v1016, %v734
      %v1049 = vmul.f32 %v1017, %v734
      %v1050 = vmul.f32 %v1018, %v734
      %v1051 = vmul.f32 %v1019, %v734
      %v1052 = vmul.f32 %v1020, %v734
      %v1053 = vmul.f32 %v1021, %v734
      %v1054 = vmul.f32 %v1022, %v734
      %vm1055 = vcmask 523264
      %1056 = vst.msk [vmem:[%s265] sm:$0xff] %vm1055, %v1023
      %1057 = vst.msk [vmem:[%s265 + $0x8] sm:$0xff] %vm1055, %v1024
      %1058 = vst.msk [vmem:[%s265 + $0x10] sm:$0xff] %vm1055, %v1025
      %1059 = vst.msk [vmem:[%s265 + $0x18] sm:$0xff] %vm1055, %v1026
      %1060 = vst.msk [vmem:[%s265 + $0x20] sm:$0xff] %vm1055, %v1027
      %1061 = vst.msk [vmem:[%s265 + $0x28] sm:$0xff] %vm1055, %v1028
      %1062 = vst.msk [vmem:[%s265 + $0x30] sm:$0xff] %vm1055, %v1029
      %1063 = vst.msk [vmem:[%s265 + $0x38] sm:$0xff] %vm1055, %v1030
      %1064 = vst.msk [vmem:[%s265 + $0x40] sm:$0xff] %vm1055, %v1031
      %1065 = vst.msk [vmem:[%s265 + $0x48] sm:$0xff] %vm1055, %v1032
      %1066 = vst.msk [vmem:[%s265 + $0x50] sm:$0xff] %vm1055, %v1033
      %1067 = vst.msk [vmem:[%s265 + $0x58] sm:$0xff] %vm1055, %v1034
      %1068 = vst.msk [vmem:[%s265 + $0x60] sm:$0xff] %vm1055, %v1035
      %1069 = vst.msk [vmem:[%s265 + $0x68] sm:$0xff] %vm1055, %v1036
      %1070 = vst.msk [vmem:[%s265 + $0x70] sm:$0xff] %vm1055, %v1037
      %1071 = vst.msk [vmem:[%s265 + $0x78] sm:$0xff] %vm1055, %v1038
      %1072 = vst.msk [vmem:[%s265 + $0x80] sm:$0xff] %vm1055, %v1039
      %1073 = vst.msk [vmem:[%s265 + $0x88] sm:$0xff] %vm1055, %v1040
      %1074 = vst.msk [vmem:[%s265 + $0x90] sm:$0xff] %vm1055, %v1041
      %1075 = vst.msk [vmem:[%s265 + $0x98] sm:$0xff] %vm1055, %v1042
      %1076 = vst.msk [vmem:[%s265 + $0xa0] sm:$0xff] %vm1055, %v1043
      %1077 = vst.msk [vmem:[%s265 + $0xa8] sm:$0xff] %vm1055, %v1044
      %1078 = vst.msk [vmem:[%s265 + $0xb0] sm:$0xff] %vm1055, %v1045
      %1079 = vst.msk [vmem:[%s265 + $0xb8] sm:$0xff] %vm1055, %v1046
      %1080 = vst.msk [vmem:[%s265 + $0xc0] sm:$0xff] %vm1055, %v1047
      %1081 = vst.msk [vmem:[%s265 + $0xc8] sm:$0xff] %vm1055, %v1048
      %1082 = vst.msk [vmem:[%s265 + $0xd0] sm:$0xff] %vm1055, %v1049
      %1083 = vst.msk [vmem:[%s265 + $0xd8] sm:$0xff] %vm1055, %v1050
      %1084 = vst.msk [vmem:[%s265 + $0xe0] sm:$0xff] %vm1055, %v1051
      %1085 = vst.msk [vmem:[%s265 + $0xe8] sm:$0xff] %vm1055, %v1052
      %1086 = vst.msk [vmem:[%s265 + $0xf0] sm:$0xff] %vm1055, %v1053
      %1087 = vst.msk [vmem:[%s265 + $0xf8] sm:$0xff] %vm1055, %v1054
      %p1088 = scmp.lt.s32.totalorder %s19, 1
      %s1089 = scalar_select %p1088, %s19, 1
      %p1090 = scmp.lt.s32.totalorder %s20, 0
      %s1091 = scalar_select %p1090, %s20, 0
      %s1092 = smul.addr %s1089, 32
      %s1093 = sadd.s32 %s1091, %s1092
      %s1094 = smul.addr %s1093, 8
      %s1095 = scalar_lea.vmem %s4, %s1094
      // Predicated region
      $region37: #{cbam3d_forward.5} parent=35 // pred_check
        %p1096 = pneg %p148
      $region38: #{cbam3d_forward.5} parent=35 // pred_check_branch
        %1098 = sbr.rel (%p1096) target = $region40
      $region39: #{cbam3d_forward.5} parent=35 // pred_region
        _
      $region40: #{cbam3d_forward.5} parent=35 // pred_fallthru
        _
    $region36: #{cbam3d_forward.5} parent=5 // pred_fallthru
      _
    %p1099 = scmp.le.s32.totalorder 2, %s10
    // Predicated region
    $region41: #{cbam3d_forward.5} parent=5 // pred_check
      %p1100 = pneg %p1099
    $region42: #{cbam3d_forward.5} parent=5 // pred_check_branch
      %1102 = sbr.rel (%p1100) target = $region44
    $region43: #{cbam3d_forward.5} parent=5 // pred_region
      %s1103 = ssub.s32 %s10, 2
      // Predicated region
      $region45: #{cbam3d_forward.5} parent=43 // pred_check
        %p1104 = pneg %p154
      $region46: #{cbam3d_forward.5} parent=43 // pred_check_branch
        %1106 = sbr.rel (%p1104) target = $region48
      $region47: #{cbam3d_forward.5} parent=43 // pred_region
        %p1107 = scmp.lt.s32.totalorder %s21, 1
        %s1108 = scalar_select %p1107, %s21, 1
        %p1109 = scmp.lt.s32.totalorder %s22, 0
        %s1110 = scalar_select %p1109, %s22, 0
        %s1111 = smul.addr %s1108, 32
        %s1112 = sadd.s32 %s1110, %s1111
        %s1113 = smul.addr %s1112, 8
        %s1114 = scalar_lea.vmem %s4, %s1113
      $region48: #{cbam3d_forward.5} parent=43 // pred_fallthru
        _
    $region44: #{cbam3d_forward.5} parent=5 // pred_fallthru
      _
  $region6: #{cbam3d_forward.5} parent=0 // loop_footer
    %s14 = sadd.s32 1, %s10
  $region7: #{cbam3d_forward.5} parent=0 // loop_footer_branch
    %9 = sbr.rel target = $region3
  $region8: #{cbam3d_forward.5} parent=0 // loop_exit
    _

</llo_original>
